<compile_context>
chip_gen: v5e
topology: v5e:2x2
jax: 0.10.0
libtpu: 0.0.40
codegen_flags: <defaults>
</compile_context>

<pallas_src>
import jax
import jax.numpy as jnp
import numpy as np
from jax.experimental import pallas as pl
from jax.experimental.pallas import tpu as pltpu


def cpcm_fused_kernel(x_ref, w_ref, shift_ref, w1_ref, w2_ref, out_ref, attn_ref):
    # x_ref:     (1, T*HW, Cin)   one clip, channels-last, spatial flattened
    # w_ref:     (Cin, Cout)      1x1 conv weight with BN scale folded in
    # shift_ref: (1, Cout)        BN shift
    # w1_ref:    (T, T//2), w2_ref: (T//2, T)   attention MLP (pre-transposed)
    # out_ref:   (1, Cout, T*HW)  weighted features, channels-first (lane-dense)
    # attn_ref:  (1, 1, T)        temporal attention weights
    T = attn_ref.shape[-1]
    Cout = out_ref.shape[1]
    HW = out_ref.shape[2] // T

    # 1x1 conv as one big matmul (M = T*HW), BN shift + ReLU epilogue.
    x = x_ref[0]                                                      # (T*HW, Cin)
    y = jnp.dot(x, w_ref[...], preferred_element_type=jnp.float32)    # (T*HW, Cout)
    y = jnp.maximum(y + shift_ref[...], 0.0)
    y3 = y.reshape(T, HW, Cout)                                       # (T, HW, Cout)

    # Per-frame global average pool over spatial and channel dims -> (1, T).
    p = jnp.mean(jnp.mean(y3, axis=2), axis=1).reshape(1, T)

    # Temporal attention MLP: Linear -> ReLU -> Linear -> Softmax (exact).
    h = jnp.maximum(jnp.dot(p, w1_ref[...], preferred_element_type=jnp.float32), 0.0)
    logits = jnp.dot(h, w2_ref[...], preferred_element_type=jnp.float32)   # (1, T)
    m = jnp.max(logits, axis=-1, keepdims=True)
    e = jnp.exp(logits - m)
    attn = e / jnp.sum(e, axis=-1, keepdims=True)                     # (1, T)
    attn_ref[0] = attn

    # Per-frame weighting, then transpose so the store is lane-dense and the HBM
    # layout is already (Cout, T*HW) == PyTorch (Cout, T, H, W) flattened.
    weighted = (y3 * attn.reshape(T, 1, 1)).reshape(T * HW, Cout)     # (T*HW, Cout)
    out_ref[0] = weighted.T                                           # (Cout, T*HW)


def cpcm_forward(x_nchw, params, num_frames):
    N, Cin, H, W = x_nchw.shape
    T = num_frames
    B = N // T
    HW = H * W
    Cout = params["w_conv"].shape[1]
    eps = 1e-5

    # NCHW -> channels-last, flattened per clip: (B, T*HW, Cin).
    x = jnp.transpose(x_nchw, (0, 2, 3, 1)).reshape(B, T * HW, Cin)

    # Fold BatchNorm (inference mode) scale into the conv weight; keep only the shift.
    # TODO(synk): PyTorch module default is train-mode BN (batch stats); here BN uses running stats.
    scale = params["bn_gamma"] / jnp.sqrt(params["bn_var"] + eps)
    w_folded = params["w_conv"] * scale[None, :]
    shift = (params["bn_beta"] - params["bn_mean"] * scale).reshape(1, Cout)

    weighted_t, attn = pl.pallas_call(
        cpcm_fused_kernel,
        out_shape=(
            jax.ShapeDtypeStruct((B, Cout, T * HW), jnp.float32),
            jax.ShapeDtypeStruct((B, 1, T), jnp.float32),
        ),
        grid_spec=pltpu.PrefetchScalarGridSpec(
            num_scalar_prefetch=0,
            grid=(B,),
            in_specs=[
                pl.BlockSpec((1, T * HW, Cin), lambda b: (b, 0, 0)),
                pl.BlockSpec((Cin, Cout), lambda b: (0, 0)),
                pl.BlockSpec((1, Cout), lambda b: (0, 0)),
                pl.BlockSpec((T, T // 2), lambda b: (0, 0)),
                pl.BlockSpec((T // 2, T), lambda b: (0, 0)),
            ],
            out_specs=[
                pl.BlockSpec((1, Cout, T * HW), lambda b: (b, 0, 0)),
                pl.BlockSpec((1, 1, T), lambda b: (b, 0, 0)),
            ],
        ),
        compiler_params=pltpu.CompilerParams(dimension_semantics=("parallel",)),
    )(x, w_folded, shift, params["w_fc1"], params["w_fc2"])

    # Kernel already emitted channels-first; splitting T*HW -> (T, H, W) is a free
    # metadata reshape (no HBM transpose).
    weighted_features = weighted_t.reshape(B, Cout, T, H, W)
    time_attention = attn.reshape(B, T)
    return weighted_features, time_attention


def cpcm_reference(x_nchw, params, num_frames):
    """Pure-JAX reference mirroring the PyTorch forward (BN in inference mode)."""
    N, Cin, H, W = x_nchw.shape
    T = num_frames
    B = N // T
    Cout = params["w_conv"].shape[1]
    eps = 1e-5
    y = jnp.einsum("nchw,co->nohw", x_nchw, params["w_conv"])
    scale = params["bn_gamma"] / jnp.sqrt(params["bn_var"] + eps)
    shift = params["bn_beta"] - params["bn_mean"] * scale
    y = jnp.maximum(y * scale[None, :, None, None] + shift[None, :, None, None], 0.0)
    x5 = jnp.transpose(y.reshape(B, T, Cout, H, W), (0, 2, 1, 3, 4))  # (B,Cout,T,H,W)
    pooled = jnp.mean(x5, axis=(3, 4))                                # (B, Cout, T)
    pmean = jnp.mean(pooled, axis=1)                                  # (B, T)
    h = jnp.maximum(pmean @ params["w_fc1"], 0.0)
    attn = jax.nn.softmax(h @ params["w_fc2"], axis=1)
    weighted = x5 * attn[:, None, :, None, None]
    return weighted, attn


if __name__ == "__main__":
    # Small shapes consistent with the module: num_frames=8, feature_dim=64, output_dim=32
    B, T, Cin, Cout, H, W = 2, 8, 64, 32, 8, 8
    N = B * T

    key = jax.random.PRNGKey(0)
    ks = jax.random.split(key, 8)
    params = {
        # Conv2d(feature_dim, output_dim, 1x1, bias=False): weight (Cout,Cin,1,1) -> stored as (Cin,Cout)
        "w_conv": (jax.random.normal(ks[0], (Cin, Cout), jnp.float32) * 0.05),
        "bn_gamma": jax.random.uniform(ks[1], (Cout,), jnp.float32, 0.5, 1.5),
        "bn_beta": jax.random.normal(ks[2], (Cout,), jnp.float32) * 0.1,
        "bn_mean": jax.random.normal(ks[3], (Cout,), jnp.float32) * 0.1,
        "bn_var": jax.random.uniform(ks[4], (Cout,), jnp.float32, 0.5, 1.5),
        # Linear(T, T//2, bias=False): weight (T//2, T) in PyTorch -> stored transposed (T, T//2)
        "w_fc1": jax.random.normal(ks[5], (T, T // 2), jnp.float32) * 0.3,
        "w_fc2": jax.random.normal(ks[6], (T // 2, T), jnp.float32) * 0.3,
    }
    x = jax.random.normal(ks[7], (N, Cin, H, W), jnp.float32)

    weighted, attn = jax.jit(cpcm_forward, static_argnums=2)(x, params, T)
    jax.block_until_ready((weighted, attn))

    ref_w, ref_a = cpcm_reference(x, params, T)
    assert weighted.shape == (B, Cout, T, H, W)
    assert attn.shape == (B, T)
    np.testing.assert_allclose(np.asarray(attn), np.asarray(ref_a), rtol=1e-4, atol=1e-5)
    np.testing.assert_allclose(np.asarray(weighted), np.asarray(ref_w), rtol=1e-4, atol=1e-4)

    print("KERNEL_OK")
</pallas_src>

<mosaic_0001>
module attributes {stable_mosaic.version = 11 : i64} {
  func.func @cpcm_fused_kernel(%arg0: i32, %arg1: memref<1x512x64xf32, #tpu.memory_space<vmem>>, %arg2: memref<64x32xf32, #tpu.memory_space<vmem>>, %arg3: memref<1x32xf32, #tpu.memory_space<vmem>>, %arg4: memref<8x4xf32, #tpu.memory_space<vmem>>, %arg5: memref<4x8xf32, #tpu.memory_space<vmem>>, %arg6: memref<1x32x512xf32, #tpu.memory_space<vmem>>, %arg7: memref<1x1x8xf32, #tpu.memory_space<vmem>>) attributes {dimension_semantics = [#tpu.dimension_semantics<parallel>], iteration_bounds = array<i64: 2>, scalar_prefetch = 0 : i64, scratch_operands = 0 : i64, tpu.core_type = #tpu.core_type<tc>, window_params = [{transform_indices = @transform_0, window_bounds = array<i64: 1, 512, 64>}, {pipeline_mode = #tpu.pipeline_mode<synchronous>, transform_indices = @transform_1, window_bounds = array<i64: 64, 32>}, {pipeline_mode = #tpu.pipeline_mode<synchronous>, transform_indices = @transform_2, window_bounds = array<i64: 1, 32>}, {pipeline_mode = #tpu.pipeline_mode<synchronous>, transform_indices = @transform_3, window_bounds = array<i64: 8, 4>}, {pipeline_mode = #tpu.pipeline_mode<synchronous>, transform_indices = @transform_4, window_bounds = array<i64: 4, 8>}, {transform_indices = @transform_5, window_bounds = array<i64: 1, 32, 512>}, {transform_indices = @transform_6, window_bounds = array<i64: 1, 1, 8>}]} {
    %c0 = arith.constant 0 : index
    %c0_0 = arith.constant 0 : index
    %c0_1 = arith.constant 0 : index
    %0 = vector.load %arg1[%c0, %c0_0, %c0_1] : memref<1x512x64xf32, #tpu.memory_space<vmem>>, vector<1x512x64xf32>
    %1 = vector.shape_cast %0 : vector<1x512x64xf32> to vector<512x64xf32>
    %c0_2 = arith.constant 0 : index
    %c0_3 = arith.constant 0 : index
    %2 = vector.load %arg2[%c0_2, %c0_3] : memref<64x32xf32, #tpu.memory_space<vmem>>, vector<64x32xf32>
    %cst = arith.constant dense<0.000000e+00> : vector<512x32xf32>
    %3 = tpu.matmul %1, %2, %cst {dimension_numbers = #tpu.dot_dimension_numbers<[1], [0], [0], [1], [0, 0, 1, 1], [], []>} : vector<512x64xf32>, vector<64x32xf32>, vector<512x32xf32> -> vector<512x32xf32>
    %c0_4 = arith.constant 0 : index
    %c0_5 = arith.constant 0 : index
    %4 = vector.load %arg3[%c0_4, %c0_5] : memref<1x32xf32, #tpu.memory_space<vmem>>, vector<1x32xf32>
    %5 = vector.broadcast %4 : vector<1x32xf32> to vector<512x32xf32>
    %6 = arith.addf %3, %5 : vector<512x32xf32>
    %cst_6 = arith.constant 0.000000e+00 : f32
    %7 = vector.broadcast %cst_6 : f32 to vector<512x32xf32>
    %8 = arith.maximumf %6, %7 : vector<512x32xf32>
    %9 = vector.shape_cast %8 : vector<512x32xf32> to vector<8x64x32xf32>
    %cst_7 = arith.constant dense<0.000000e+00> : vector<8x64xf32>
    %10 = vector.multi_reduction <add>, %9, %cst_7 [2] : vector<8x64x32xf32> to vector<8x64xf32>
    %cst_8 = arith.constant 3.200000e+01 : f32
    %11 = vector.broadcast %cst_8 : f32 to vector<8x64xf32>
    %12 = arith.divf %10, %11 : vector<8x64xf32>
    %cst_9 = arith.constant dense<0.000000e+00> : vector<8xf32>
    %13 = vector.multi_reduction <add>, %12, %cst_9 [1] : vector<8x64xf32> to vector<8xf32>
    %cst_10 = arith.constant 6.400000e+01 : f32
    %14 = vector.broadcast %cst_10 : f32 to vector<8xf32>
    %15 = arith.divf %13, %14 : vector<8xf32>
    %16 = vector.shape_cast %15 : vector<8xf32> to vector<1x8xf32>
    %c0_11 = arith.constant 0 : index
    %c0_12 = arith.constant 0 : index
    %17 = vector.load %arg4[%c0_11, %c0_12] : memref<8x4xf32, #tpu.memory_space<vmem>>, vector<8x4xf32>
    %cst_13 = arith.constant dense<0.000000e+00> : vector<1x4xf32>
    %18 = tpu.matmul %16, %17, %cst_13 {dimension_numbers = #tpu.dot_dimension_numbers<[1], [0], [0], [1], [0, 0, 1, 1], [], []>} : vector<1x8xf32>, vector<8x4xf32>, vector<1x4xf32> -> vector<1x4xf32>
    %cst_14 = arith.constant 0.000000e+00 : f32
    %19 = vector.broadcast %cst_14 : f32 to vector<1x4xf32>
    %20 = arith.maximumf %18, %19 : vector<1x4xf32>
    %c0_15 = arith.constant 0 : index
    %c0_16 = arith.constant 0 : index
    %21 = vector.load %arg5[%c0_15, %c0_16] : memref<4x8xf32, #tpu.memory_space<vmem>>, vector<4x8xf32>
    %cst_17 = arith.constant dense<0.000000e+00> : vector<1x8xf32>
    %22 = tpu.matmul %20, %21, %cst_17 {dimension_numbers = #tpu.dot_dimension_numbers<[1], [0], [0], [1], [0, 0, 1, 1], [], []>} : vector<1x4xf32>, vector<4x8xf32>, vector<1x8xf32> -> vector<1x8xf32>
    %cst_18 = arith.constant dense<0xFF800000> : vector<1xf32>
    %23 = vector.multi_reduction <maximumf>, %22, %cst_18 [1] : vector<1x8xf32> to vector<1xf32>
    %24 = vector.shape_cast %23 : vector<1xf32> to vector<1x1xf32>
    %25 = vector.broadcast %24 : vector<1x1xf32> to vector<1x8xf32>
    %26 = arith.subf %22, %25 : vector<1x8xf32>
    %27 = math.exp %26 : vector<1x8xf32>
    %cst_19 = arith.constant dense<0.000000e+00> : vector<1xf32>
    %28 = vector.multi_reduction <add>, %27, %cst_19 [1] : vector<1x8xf32> to vector<1xf32>
    %29 = vector.shape_cast %28 : vector<1xf32> to vector<1x1xf32>
    %30 = vector.broadcast %29 : vector<1x1xf32> to vector<1x8xf32>
    %31 = arith.divf %27, %30 : vector<1x8xf32>
    %c0_20 = arith.constant 0 : index
    %c0_21 = arith.constant 0 : index
    %c0_22 = arith.constant 0 : index
    %32 = vector.load %arg7[%c0_20, %c0_21, %c0_22] : memref<1x1x8xf32, #tpu.memory_space<vmem>>, vector<1x1x8xf32>
    %33 = vector.shape_cast %32 : vector<1x1x8xf32> to vector<1x8xf32>
    %34 = vector.shape_cast %31 : vector<1x8xf32> to vector<1x1x8xf32>
    tpu.vector_store %arg7[%c0_20, %c0_21, %c0_22], %34 {strides = array<i32>} : memref<1x1x8xf32, #tpu.memory_space<vmem>>, vector<1x1x8xf32>,
    %35 = vector.shape_cast %31 : vector<1x8xf32> to vector<8x1x1xf32>
    %36 = vector.broadcast %35 : vector<8x1x1xf32> to vector<8x64x32xf32>
    %37 = arith.mulf %9, %36 : vector<8x64x32xf32>
    %38 = vector.shape_cast %37 : vector<8x64x32xf32> to vector<512x32xf32>
    %39 = tpu.transpose %38, [1, 0] : vector<512x32xf32> -> vector<32x512xf32>
    %c0_23 = arith.constant 0 : index
    %c0_24 = arith.constant 0 : index
    %c0_25 = arith.constant 0 : index
    %40 = vector.load %arg6[%c0_23, %c0_24, %c0_25] : memref<1x32x512xf32, #tpu.memory_space<vmem>>, vector<1x32x512xf32>
    %41 = vector.shape_cast %40 : vector<1x32x512xf32> to vector<32x512xf32>
    %42 = vector.shape_cast %39 : vector<32x512xf32> to vector<1x32x512xf32>
    tpu.vector_store %arg6[%c0_23, %c0_24, %c0_25], %42 {strides = array<i32>} : memref<1x32x512xf32, #tpu.memory_space<vmem>>, vector<1x32x512xf32>,
    return
  }
  func.func @transform_0(%arg0: i32) -> (i32, i32, i32) {
    %c0_i32 = arith.constant 0 : i32
    %c0_i32_0 = arith.constant 0 : i32
    %c0_i32_1 = arith.constant 0 : i32
    return %arg0, %c0_i32, %c0_i32_0 : i32, i32, i32
  }
  func.func @transform_1(%arg0: i32) -> (i32, i32) {
    %c0_i32 = arith.constant 0 : i32
    %c0_i32_0 = arith.constant 0 : i32
    %c0_i32_1 = arith.constant 0 : i32
    return %c0_i32, %c0_i32_0 : i32, i32
  }
  func.func @transform_2(%arg0: i32) -> (i32, i32) {
    %c0_i32 = arith.constant 0 : i32
    %c0_i32_0 = arith.constant 0 : i32
    %c0_i32_1 = arith.constant 0 : i32
    return %c0_i32, %c0_i32_0 : i32, i32
  }
  func.func @transform_3(%arg0: i32) -> (i32, i32) {
    %c0_i32 = arith.constant 0 : i32
    %c0_i32_0 = arith.constant 0 : i32
    %c0_i32_1 = arith.constant 0 : i32
    return %c0_i32, %c0_i32_0 : i32, i32
  }
  func.func @transform_4(%arg0: i32) -> (i32, i32) {
    %c0_i32 = arith.constant 0 : i32
    %c0_i32_0 = arith.constant 0 : i32
    %c0_i32_1 = arith.constant 0 : i32
    return %c0_i32, %c0_i32_0 : i32, i32
  }
  func.func @transform_5(%arg0: i32) -> (i32, i32, i32) {
    %c0_i32 = arith.constant 0 : i32
    %c0_i32_0 = arith.constant 0 : i32
    %c0_i32_1 = arith.constant 0 : i32
    return %arg0, %c0_i32, %c0_i32_0 : i32, i32, i32
  }
  func.func @transform_6(%arg0: i32) -> (i32, i32, i32) {
    %c0_i32 = arith.constant 0 : i32
    %c0_i32_0 = arith.constant 0 : i32
    %c0_i32_1 = arith.constant 0 : i32
    return %arg0, %c0_i32, %c0_i32_0 : i32, i32, i32
  }
}

</mosaic_0001>

<llo_original>
// kernel: cpcm_forward.1
$region0: #{cpcm_forward.1}
  #allocation0 [shape = 'u32[]', space=smem, size = 0x4, offset = 0x4, fixed_abs, tag = 'smem constant byte address 0x4 - core index']
  #allocation1 [shape = 'u32[72,128]{1,0:T(1,128)}', space=vmem, size = 0x9000, scoped, tag = 'internal scratch']
  %s0 = inlined_call_operand.hbm [shape: f32[2,512,64], index: 0, kind: input, shape index: {}]
  %s1 = inlined_call_operand.vmem [shape: f32[64,32], index: 1, kind: input, shape index: {}]
  %s2 = inlined_call_operand.vmem [shape: f32[1,32], index: 2, kind: input, shape index: {}]
  %s3 = inlined_call_operand.vmem [shape: f32[8,4], index: 3, kind: input, shape index: {}]
  %s4 = inlined_call_operand.vmem [shape: f32[4,8], index: 4, kind: input, shape index: {}]
  %s5 = inlined_call_operand.vmem [shape: f32[2,32,512], index: 5, kind: output, shape index: {0}]
  %s6 = inlined_call_operand.hbm [shape: f32[2,1,8], index: 6, kind: output, shape index: {1}]
  %7 = xla_tuple %s5, %s6
  %s8 = sld [smem:[#allocation0]]
  $region65: #{cpcm_forward.1} parent=0
    _
  %s10 = ssub.s32 1, %s8
  %s11 = scalar_select 0, %s10, %s8
  $region1: #{cpcm_forward.1} parent=0
    #allocation2 [shape = 'u8[524288]{0}', space=vmem, size = 0x80000, scoped, tag = 'input window, operand 0']
    #allocation3 [shape = 's32[2]{0}', space=sflag, size = 0x8, scoped, tag = 'scoped memory for cpcm_forward.1']
    #allocation4 [shape = 's32[2]{0}', space=sflag, size = 0x8, scoped, tag = 'scoped memory for cpcm_forward.1']
    #allocation5 [shape = 'u8[1024]{0}', space=vmem, size = 0x400, scoped, tag = 'output window, operand 1']
    %12 = vsyncpa [#allocation3], 0
    %s13 = scalar_lea.sflag [#allocation3], 1
    %14 = vsyncpa %s13, 0
    %15 = vsyncpa [#allocation4], 0
    %s16 = scalar_lea.sflag [#allocation4], 1
    %17 = vsyncpa %s16, 0
    loop: start=0, step=1, limit=4
    $region2: #{cpcm_forward.1} parent=1 // loop_pre_header
      _
    $region3: #{cpcm_forward.1} parent=1 // loop_header
      %s19 = sphi 0, %s23
      %p20 = scmp.ge.s32.totalorder %s19, 4
      %s29 = sphi 0, %s31
      %s32 = sphi 0, %s29
      %s33 = sphi 0, %s32
      %s49 = sphi 0, %s33
      %s53 = sphi 0, %s53
      %s55 = sphi 0, %s53
      %s56 = sphi 0, %s55
      %s70 = sphi 0, %s56
      %s74 = sphi 0, %s74
      %s76 = sphi 0, %s74
      %s77 = sphi 0, %s76
      %s91 = sphi 0, %s77
      %s95 = sphi 0, %s95
      %s97 = sphi 0, %s95
      %s98 = sphi 0, %s97
      %s112 = sphi 0, %s98
      %s116 = sphi 0, %s116
      %s118 = sphi 0, %s116
      %s119 = sphi 0, %s118
      %s133 = sphi 0, %s119
      %s139 = sphi 0, %s141
      %s142 = sphi 0, %s139
      %s143 = sphi 0, %s142
      %s159 = sphi 0, %s143
      %s165 = sphi 0, %s167
      %s168 = sphi 0, %s165
      %s169 = sphi 0, %s168
      %s185 = sphi 0, %s169
    $region4: #{cpcm_forward.1} parent=1 // loop_header_branch
      %22 = sbr.rel (%p20) target = $region8
    $region5: #{cpcm_forward.1} parent=1 // loop_body
      %s24 = ssub.s32 %s19, 1
      %s25 = ssub.s32 %s19, 2
      %s26 = sadd.s32 %s19, 1
      %s27 = ssub.s32 %s19, %s26
      %p28 = scmp.eq.s32.totalorder %s27, 0
      %s30 = sadd.s32 %s29, 1
      %s31 = scalar_select %p28, %s29, %s30
      %p34 = pneg %p28
      %p35 = scmp.eq.s32.totalorder %s19, 1
      %p36 = por %p34, %p35
      %p37 = scmp.ne.s32.totalorder %s29, %s32
      %p38 = scmp.eq.s32.totalorder %s19, 0
      %p39 = por %p37, %p38
      %p40 = scmp.ne.s32.totalorder %s29, %s32
      %p41 = scmp.eq.s32.totalorder %s24, 1
      %p42 = por %p40, %p41
      %p43 = scmp.ne.s32.totalorder %s32, %s33
      %p44 = scmp.eq.s32.totalorder %s24, 0
      %p45 = por %p43, %p44
      %p46 = scmp.ne.s32.totalorder %s32, %s33
      %p47 = scmp.eq.s32.totalorder %s25, 1
      %p48 = por %p46, %p47
      %p50 = scmp.ne.s32.totalorder %s33, %s49
      %p51 = scmp.eq.s32.totalorder %s25, 0
      %p52 = por %p50, %p51
      %s54 = sadd.s32 %s53, 1
      %p57 = scmp.eq.s32.totalorder %s19, 1
      %p58 = scmp.ne.s32.totalorder %s53, %s55
      %p59 = scmp.eq.s32.totalorder %s19, 0
      %p60 = por %p58, %p59
      %p61 = scmp.ne.s32.totalorder %s53, %s55
      %p62 = scmp.eq.s32.totalorder %s24, 1
      %p63 = por %p61, %p62
      %p64 = scmp.ne.s32.totalorder %s55, %s56
      %p65 = scmp.eq.s32.totalorder %s24, 0
      %p66 = por %p64, %p65
      %p67 = scmp.ne.s32.totalorder %s55, %s56
      %p68 = scmp.eq.s32.totalorder %s25, 1
      %p69 = por %p67, %p68
      %p71 = scmp.ne.s32.totalorder %s56, %s70
      %p72 = scmp.eq.s32.totalorder %s25, 0
      %p73 = por %p71, %p72
      %s75 = sadd.s32 %s74, 1
      %p78 = scmp.eq.s32.totalorder %s19, 1
      %p79 = scmp.ne.s32.totalorder %s74, %s76
      %p80 = scmp.eq.s32.totalorder %s19, 0
      %p81 = por %p79, %p80
      %p82 = scmp.ne.s32.totalorder %s74, %s76
      %p83 = scmp.eq.s32.totalorder %s24, 1
      %p84 = por %p82, %p83
      %p85 = scmp.ne.s32.totalorder %s76, %s77
      %p86 = scmp.eq.s32.totalorder %s24, 0
      %p87 = por %p85, %p86
      %p88 = scmp.ne.s32.totalorder %s76, %s77
      %p89 = scmp.eq.s32.totalorder %s25, 1
      %p90 = por %p88, %p89
      %p92 = scmp.ne.s32.totalorder %s77, %s91
      %p93 = scmp.eq.s32.totalorder %s25, 0
      %p94 = por %p92, %p93
      %s96 = sadd.s32 %s95, 1
      %p99 = scmp.eq.s32.totalorder %s19, 1
      %p100 = scmp.ne.s32.totalorder %s95, %s97
      %p101 = scmp.eq.s32.totalorder %s19, 0
      %p102 = por %p100, %p101
      %p103 = scmp.ne.s32.totalorder %s95, %s97
      %p104 = scmp.eq.s32.totalorder %s24, 1
      %p105 = por %p103, %p104
      %p106 = scmp.ne.s32.totalorder %s97, %s98
      %p107 = scmp.eq.s32.totalorder %s24, 0
      %p108 = por %p106, %p107
      %p109 = scmp.ne.s32.totalorder %s97, %s98
      %p110 = scmp.eq.s32.totalorder %s25, 1
      %p111 = por %p109, %p110
      %p113 = scmp.ne.s32.totalorder %s98, %s112
      %p114 = scmp.eq.s32.totalorder %s25, 0
      %p115 = por %p113, %p114
      %s117 = sadd.s32 %s116, 1
      %p120 = scmp.eq.s32.totalorder %s19, 1
      %p121 = scmp.ne.s32.totalorder %s116, %s118
      %p122 = scmp.eq.s32.totalorder %s19, 0
      %p123 = por %p121, %p122
      %p124 = scmp.ne.s32.totalorder %s116, %s118
      %p125 = scmp.eq.s32.totalorder %s24, 1
      %p126 = por %p124, %p125
      %p127 = scmp.ne.s32.totalorder %s118, %s119
      %p128 = scmp.eq.s32.totalorder %s24, 0
      %p129 = por %p127, %p128
      %p130 = scmp.ne.s32.totalorder %s118, %s119
      %p131 = scmp.eq.s32.totalorder %s25, 1
      %p132 = por %p130, %p131
      %p134 = scmp.ne.s32.totalorder %s119, %s133
      %p135 = scmp.eq.s32.totalorder %s25, 0
      %p136 = por %p134, %p135
      %s137 = ssub.s32 %s19, %s26
      %p138 = scmp.eq.s32.totalorder %s137, 0
      %s140 = sadd.s32 %s139, 1
      %s141 = scalar_select %p138, %s139, %s140
      %p144 = pneg %p138
      %p145 = scmp.eq.s32.totalorder %s19, 1
      %p146 = por %p144, %p145
      %p147 = scmp.ne.s32.totalorder %s139, %s142
      %p148 = scmp.eq.s32.totalorder %s19, 0
      %p149 = por %p147, %p148
      %p150 = scmp.ne.s32.totalorder %s139, %s142
      %p151 = scmp.eq.s32.totalorder %s24, 1
      %p152 = por %p150, %p151
      %p153 = scmp.ne.s32.totalorder %s142, %s143
      %p154 = scmp.eq.s32.totalorder %s24, 0
      %p155 = por %p153, %p154
      %p156 = scmp.ne.s32.totalorder %s142, %s143
      %p157 = scmp.eq.s32.totalorder %s25, 1
      %p158 = por %p156, %p157
      %p160 = scmp.ne.s32.totalorder %s143, %s159
      %p161 = scmp.eq.s32.totalorder %s25, 0
      %p162 = por %p160, %p161
      %s163 = ssub.s32 %s19, %s26
      %p164 = scmp.eq.s32.totalorder %s163, 0
      %s166 = sadd.s32 %s165, 1
      %s167 = scalar_select %p164, %s165, %s166
      %p170 = pneg %p164
      %p171 = scmp.eq.s32.totalorder %s19, 1
      %p172 = por %p170, %p171
      %p173 = scmp.ne.s32.totalorder %s165, %s168
      %p174 = scmp.eq.s32.totalorder %s19, 0
      %p175 = por %p173, %p174
      %p176 = scmp.ne.s32.totalorder %s165, %s168
      %p177 = scmp.eq.s32.totalorder %s24, 1
      %p178 = por %p176, %p177
      %p179 = scmp.ne.s32.totalorder %s168, %s169
      %p180 = scmp.eq.s32.totalorder %s24, 0
      %p181 = por %p179, %p180
      %p182 = scmp.ne.s32.totalorder %s168, %s169
      %p183 = scmp.eq.s32.totalorder %s25, 1
      %p184 = por %p182, %p183
      %p186 = scmp.ne.s32.totalorder %s169, %s185
      %p187 = scmp.eq.s32.totalorder %s25, 0
      %p188 = por %p186, %p187
      %p189 = scmp.le.s32.totalorder 1, %s19
      %p190 = scmp.lt.s32.totalorder %s19, 3
      %p191 = pnand %p189, %p190
      %p192 = pneg %p191
      // Predicated region
      $region9: #{cpcm_forward.1} parent=5 // pred_check
        _
      $region10: #{cpcm_forward.1} parent=5 // pred_check_branch
        %194 = sbr.rel (%p191) target = $region12
      $region11: #{cpcm_forward.1} parent=5 // pred_region
        %s195 = ssub.s32 %s19, 1
        // Predicated region
        $region13: #{cpcm_forward.1} parent=11 // pred_check
          %p196 = pneg %p66
        $region14: #{cpcm_forward.1} parent=11 // pred_check_branch
          %198 = sbr.rel (%p196) target = $region16
        $region15: #{cpcm_forward.1} parent=11 // pred_region
          _
        $region16: #{cpcm_forward.1} parent=11 // pred_fallthru
          _
        // Predicated region
        $region17: #{cpcm_forward.1} parent=11 // pred_check
          %p199 = pneg %p87
        $region18: #{cpcm_forward.1} parent=11 // pred_check_branch
          %201 = sbr.rel (%p199) target = $region20
        $region19: #{cpcm_forward.1} parent=11 // pred_region
          _
        $region20: #{cpcm_forward.1} parent=11 // pred_fallthru
          _
        // Predicated region
        $region21: #{cpcm_forward.1} parent=11 // pred_check
          %p202 = pneg %p108
        $region22: #{cpcm_forward.1} parent=11 // pred_check_branch
          %204 = sbr.rel (%p202) target = $region24
        $region23: #{cpcm_forward.1} parent=11 // pred_region
          _
        $region24: #{cpcm_forward.1} parent=11 // pred_fallthru
          _
        // Predicated region
        $region25: #{cpcm_forward.1} parent=11 // pred_check
          %p205 = pneg %p129
        $region26: #{cpcm_forward.1} parent=11 // pred_check_branch
          %207 = sbr.rel (%p205) target = $region28
        $region27: #{cpcm_forward.1} parent=11 // pred_region
          _
        $region28: #{cpcm_forward.1} parent=11 // pred_fallthru
          _
      $region12: #{cpcm_forward.1} parent=5 // pred_fallthru
        _
      %p208 = scmp.lt.s32.totalorder %s19, 2
      // Predicated region
      $region29: #{cpcm_forward.1} parent=5 // pred_check
        %p209 = pneg %p208
      $region30: #{cpcm_forward.1} parent=5 // pred_check_branch
        %211 = sbr.rel (%p209) target = $region32
      $region31: #{cpcm_forward.1} parent=5 // pred_region
        // Predicated region
        $region33: #{cpcm_forward.1} parent=31 // pred_check
          %p212 = pneg %p39
        $region34: #{cpcm_forward.1} parent=31 // pred_check_branch
          %214 = sbr.rel (%p212) target = $region36
        $region35: #{cpcm_forward.1} parent=31 // pred_region
          %s215 = sand.u32 %s29, 1
          %s216 = scalar_lea.sflag [#allocation3], %s215
          %s217 = sand.u32 %s29, 1
          %s218 = smul.addr %s217, 512
          %s219 = scalar_lea.vmem [#allocation2], %s218
          %221 = vsyncadd %s216, 0
          %s222 = smul.addr %s19, 64
          %s223 = smul.addr %s222, 8
          %s224 = scalar_lea.hbm %s0, %s223
          %s225 = sshll.u32 %s224, 4
          %s226 = int_to_ptr.hbm [resolvable:$true] %s225
          %s227 = sshll.u32 %s219, 4
          %s228 = int_to_ptr.vmem [resolvable:$true] %s227
          %233 = dma.hbm_to_vmem [thread:$0]  %s226, 8192, %s228, %s216, 128, 128, 8
        $region36: #{cpcm_forward.1} parent=31 // pred_fallthru
          _
      $region32: #{cpcm_forward.1} parent=5 // pred_fallthru
        _
      %p234 = scmp.le.s32.totalorder 1, %s19
      %p235 = scmp.lt.s32.totalorder %s19, 3
      %p236 = pnand %p234, %p235
      %p237 = pneg %p236
      // Predicated region
      $region37: #{cpcm_forward.1} parent=5 // pred_check
        _
      $region38: #{cpcm_forward.1} parent=5 // pred_check_branch
        %239 = sbr.rel (%p236) target = $region40
      $region39: #{cpcm_forward.1} parent=5 // pred_region
        %s240 = ssub.s32 %s19, 1
        %s241 = sand.u32 %s32, 1
        %s242 = scalar_lea.sflag [#allocation3], %s241
        %s243 = sand.u32 %s32, 1
        %s244 = smul.addr %s243, 512
        %s245 = scalar_lea.vmem [#allocation2], %s244
        // Predicated region
        $region41: #{cpcm_forward.1} parent=39 // pred_check
          %p246 = pneg %p45
        $region42: #{cpcm_forward.1} parent=39 // pred_check_branch
          %248 = sbr.rel (%p246) target = $region44
        $region43: #{cpcm_forward.1} parent=39 // pred_region
          %250 = dma.done %s242, 8192
        $region44: #{cpcm_forward.1} parent=39 // pred_fallthru
          _
        %s251 = sand.u32 %s32, 1
        %s252 = scalar_lea.sflag [#allocation3], %s251
        %s253 = sand.u32 %s32, 1
        %s254 = smul.addr %s253, 512
        %s255 = scalar_lea.vmem [#allocation2], %s254
        %p256 = pneg %p45
        %p257 = pneg %p42
        %p258 = pneg %p66
        %p259 = pneg %p63
        %p260 = pneg %p87
        %p261 = pneg %p84
        %p262 = pneg %p108
        %p263 = pneg %p105
        %p264 = pneg %p129
        %p265 = pneg %p126
        %p266 = pneg %p155
        %p267 = pneg %p152
        %p268 = scmp.lt.s32.totalorder %s24, 1
        %s269 = scalar_select %p268, %s24, 1
        %s270 = smul.addr %s269, 16
        %s271 = smul.addr %s270, 8
        %s272 = scalar_lea.vmem %s5, %s271
        %p273 = pneg %p181
        %p274 = pneg %p178
        %s275 = sand.u32 %s168, 1
        %s276 = scalar_lea.sflag [#allocation4], %s275
        %s277 = sand.u32 %s168, 1
        %s278 = scalar_lea.vmem [#allocation5], %s277
        %p279 = scmp.lt.s32.totalorder %s24, 1
        %s280 = scalar_select %p279, %s24, 1
        %s281 = smul.addr %s280, 16
        %s282 = smul.addr %s281, 8
        %s283 = scalar_lea.vmem %s5, %s282
        %v284 = vld [vmem:[%s245] sm:$0xff]
        %v285 = vld [vmem:[%s245 + $0x8] sm:$0xff]
        %v286 = vld [vmem:[%s245 + $0x10] sm:$0xff]
        %v287 = vld [vmem:[%s245 + $0x18] sm:$0xff]
        %v288 = vld [vmem:[%s245 + $0x20] sm:$0xff]
        %v289 = vld [vmem:[%s245 + $0x28] sm:$0xff]
        %v290 = vld [vmem:[%s245 + $0x30] sm:$0xff]
        %v291 = vld [vmem:[%s245 + $0x38] sm:$0xff]
        %v292 = vld [vmem:[%s245 + $0x40] sm:$0xff]
        %v293 = vld [vmem:[%s245 + $0x48] sm:$0xff]
        %v294 = vld [vmem:[%s245 + $0x50] sm:$0xff]
        %v295 = vld [vmem:[%s245 + $0x58] sm:$0xff]
        %v296 = vld [vmem:[%s245 + $0x60] sm:$0xff]
        %v297 = vld [vmem:[%s245 + $0x68] sm:$0xff]
        %v298 = vld [vmem:[%s245 + $0x70] sm:$0xff]
        %v299 = vld [vmem:[%s245 + $0x78] sm:$0xff]
        %v300 = vld [vmem:[%s245 + $0x80] sm:$0xff]
        %v301 = vld [vmem:[%s245 + $0x88] sm:$0xff]
        %v302 = vld [vmem:[%s245 + $0x90] sm:$0xff]
        %v303 = vld [vmem:[%s245 + $0x98] sm:$0xff]
        %v304 = vld [vmem:[%s245 + $0xa0] sm:$0xff]
        %v305 = vld [vmem:[%s245 + $0xa8] sm:$0xff]
        %v306 = vld [vmem:[%s245 + $0xb0] sm:$0xff]
        %v307 = vld [vmem:[%s245 + $0xb8] sm:$0xff]
        %v308 = vld [vmem:[%s245 + $0xc0] sm:$0xff]
        %v309 = vld [vmem:[%s245 + $0xc8] sm:$0xff]
        %v310 = vld [vmem:[%s245 + $0xd0] sm:$0xff]
        %v311 = vld [vmem:[%s245 + $0xd8] sm:$0xff]
        %v312 = vld [vmem:[%s245 + $0xe0] sm:$0xff]
        %v313 = vld [vmem:[%s245 + $0xe8] sm:$0xff]
        %v314 = vld [vmem:[%s245 + $0xf0] sm:$0xff]
        %v315 = vld [vmem:[%s245 + $0xf8] sm:$0xff]
        %v316 = vld [vmem:[%s245 + $0x100] sm:$0xff]
        %v317 = vld [vmem:[%s245 + $0x108] sm:$0xff]
        %v318 = vld [vmem:[%s245 + $0x110] sm:$0xff]
        %v319 = vld [vmem:[%s245 + $0x118] sm:$0xff]
        %v320 = vld [vmem:[%s245 + $0x120] sm:$0xff]
        %v321 = vld [vmem:[%s245 + $0x128] sm:$0xff]
        %v322 = vld [vmem:[%s245 + $0x130] sm:$0xff]
        %v323 = vld [vmem:[%s245 + $0x138] sm:$0xff]
        %v324 = vld [vmem:[%s245 + $0x140] sm:$0xff]
        %v325 = vld [vmem:[%s245 + $0x148] sm:$0xff]
        %v326 = vld [vmem:[%s245 + $0x150] sm:$0xff]
        %v327 = vld [vmem:[%s245 + $0x158] sm:$0xff]
        %v328 = vld [vmem:[%s245 + $0x160] sm:$0xff]
        %v329 = vld [vmem:[%s245 + $0x168] sm:$0xff]
        %v330 = vld [vmem:[%s245 + $0x170] sm:$0xff]
        %v331 = vld [vmem:[%s245 + $0x178] sm:$0xff]
        %v332 = vld [vmem:[%s245 + $0x180] sm:$0xff]
        %v333 = vld [vmem:[%s245 + $0x188] sm:$0xff]
        %v334 = vld [vmem:[%s245 + $0x190] sm:$0xff]
        %v335 = vld [vmem:[%s245 + $0x198] sm:$0xff]
        %v336 = vld [vmem:[%s245 + $0x1a0] sm:$0xff]
        %v337 = vld [vmem:[%s245 + $0x1a8] sm:$0xff]
        %v338 = vld [vmem:[%s245 + $0x1b0] sm:$0xff]
        %v339 = vld [vmem:[%s245 + $0x1b8] sm:$0xff]
        %v340 = vld [vmem:[%s245 + $0x1c0] sm:$0xff]
        %v341 = vld [vmem:[%s245 + $0x1c8] sm:$0xff]
        %v342 = vld [vmem:[%s245 + $0x1d0] sm:$0xff]
        %v343 = vld [vmem:[%s245 + $0x1d8] sm:$0xff]
        %v344 = vld [vmem:[%s245 + $0x1e0] sm:$0xff]
        %v345 = vld [vmem:[%s245 + $0x1e8] sm:$0xff]
        %v346 = vld [vmem:[%s245 + $0x1f0] sm:$0xff]
        %v347 = vld [vmem:[%s245 + $0x1f8] sm:$0xff]
        %v348 = vld [vmem:[%s1] sm:$0xff]
        %v349 = vld [vmem:[%s1 + $0x8] sm:$0xff]
        %v350 = vld [vmem:[%s1 + $0x10] sm:$0xff]
        %v351 = vld [vmem:[%s1 + $0x18] sm:$0xff]
        %v352 = vld [vmem:[%s1 + $0x20] sm:$0xff]
        %v353 = vld [vmem:[%s1 + $0x28] sm:$0xff]
        %v354 = vld [vmem:[%s1 + $0x30] sm:$0xff]
        %v355 = vld [vmem:[%s1 + $0x38] sm:$0xff]
        %v356 = vld [vmem:[%s2] sm:$0x1]
        %v358 = vperm.slane %v356, 0
        %vm360 = vcmask 523264
        %v362 = vsel %vm360, %v284, 0
        %v365 = vsel %vm360, %v285, 0
        %v368 = vsel %vm360, %v286, 0
        %v371 = vsel %vm360, %v287, 0
        %v374 = vsel %vm360, %v288, 0
        %v377 = vsel %vm360, %v289, 0
        %v380 = vsel %vm360, %v290, 0
        %v383 = vsel %vm360, %v291, 0
        %v386 = vsel %vm360, %v292, 0
        %v389 = vsel %vm360, %v293, 0
        %v392 = vsel %vm360, %v294, 0
        %v395 = vsel %vm360, %v295, 0
        %v398 = vsel %vm360, %v296, 0
        %v401 = vsel %vm360, %v297, 0
        %v404 = vsel %vm360, %v298, 0
        %v407 = vsel %vm360, %v299, 0
        %v410 = vsel %vm360, %v300, 0
        %v413 = vsel %vm360, %v301, 0
        %v416 = vsel %vm360, %v302, 0
        %v419 = vsel %vm360, %v303, 0
        %v422 = vsel %vm360, %v304, 0
        %v425 = vsel %vm360, %v305, 0
        %v428 = vsel %vm360, %v306, 0
        %v431 = vsel %vm360, %v307, 0
        %v434 = vsel %vm360, %v308, 0
        %v437 = vsel %vm360, %v309, 0
        %v440 = vsel %vm360, %v310, 0
        %v443 = vsel %vm360, %v311, 0
        %v446 = vsel %vm360, %v312, 0
        %v449 = vsel %vm360, %v313, 0
        %v452 = vsel %vm360, %v314, 0
        %v455 = vsel %vm360, %v315, 0
        %v458 = vsel %vm360, %v316, 0
        %v461 = vsel %vm360, %v317, 0
        %v464 = vsel %vm360, %v318, 0
        %v467 = vsel %vm360, %v319, 0
        %v470 = vsel %vm360, %v320, 0
        %v473 = vsel %vm360, %v321, 0
        %v476 = vsel %vm360, %v322, 0
        %v479 = vsel %vm360, %v323, 0
        %v482 = vsel %vm360, %v324, 0
        %v485 = vsel %vm360, %v325, 0
        %v488 = vsel %vm360, %v326, 0
        %v491 = vsel %vm360, %v327, 0
        %v494 = vsel %vm360, %v328, 0
        %v497 = vsel %vm360, %v329, 0
        %v500 = vsel %vm360, %v330, 0
        %v503 = vsel %vm360, %v331, 0
        %v506 = vsel %vm360, %v332, 0
        %v509 = vsel %vm360, %v333, 0
        %v512 = vsel %vm360, %v334, 0
        %v515 = vsel %vm360, %v335, 0
        %v518 = vsel %vm360, %v336, 0
        %v521 = vsel %vm360, %v337, 0
        %v524 = vsel %vm360, %v338, 0
        %v527 = vsel %vm360, %v339, 0
        %v530 = vsel %vm360, %v340, 0
        %v533 = vsel %vm360, %v341, 0
        %v536 = vsel %vm360, %v342, 0
        %v539 = vsel %vm360, %v343, 0
        %v542 = vsel %vm360, %v344, 0
        %v545 = vsel %vm360, %v345, 0
        %v548 = vsel %vm360, %v346, 0
        %v551 = vsel %vm360, %v347, 0
        %553 = vmatpush.msra.mxu0 0.0
        %554 = vmatpush.msra.mxu0 0.0
        %555 = vmatpush.msra.mxu0 0.0
        %556 = vmatpush.msra.mxu0 0.0
        %557 = vmatpush.msra.mxu0 0.0
        %558 = vmatpush.msra.mxu0 0.0
        %559 = vmatpush.msra.mxu0 0.0
        %560 = vmatpush.msra.mxu0 0.0
        %561 = vmatpush.msra.mxu0 %v355
        %562 = vmatpush.msra.mxu0 %v354
        %563 = vmatpush.msra.mxu0 %v353
        %564 = vmatpush.msra.mxu0 %v352
        %565 = vmatpush.msra.mxu0 %v351
        %566 = vmatpush.msra.mxu0 %v350
        %567 = vmatpush.msra.mxu0 %v349
        %568 = vmatpush.msra.mxu0 %v348
        %569 = vmatmul.f32.gmra.mxu0 %v362
        %v570 = vpop.f32.mrf.mxu0
        %v571 = vadd.f32 %v358, %v570
        %572 = vmatmul.f32.gmra.mxu0 %v365
        %v573 = vpop.f32.mrf.mxu0
        %v574 = vadd.f32 %v358, %v573
        %575 = vmatmul.f32.gmra.mxu0 %v368
        %v576 = vpop.f32.mrf.mxu0
        %v577 = vadd.f32 %v358, %v576
        %578 = vmatmul.f32.gmra.mxu0 %v371
        %v579 = vpop.f32.mrf.mxu0
        %v580 = vadd.f32 %v358, %v579
        %581 = vmatmul.f32.gmra.mxu0 %v374
        %v582 = vpop.f32.mrf.mxu0
        %v583 = vadd.f32 %v358, %v582
        %584 = vmatmul.f32.gmra.mxu0 %v377
        %v585 = vpop.f32.mrf.mxu0
        %v586 = vadd.f32 %v358, %v585
        %587 = vmatmul.f32.gmra.mxu0 %v380
        %v588 = vpop.f32.mrf.mxu0
        %v589 = vadd.f32 %v358, %v588
        %590 = vmatmul.f32.gmra.mxu0 %v383
        %v591 = vpop.f32.mrf.mxu0
        %v592 = vadd.f32 %v358, %v591
        %593 = vmatmul.f32.gmra.mxu0 %v386
        %v594 = vpop.f32.mrf.mxu0
        %v595 = vadd.f32 %v358, %v594
        %596 = vmatmul.f32.gmra.mxu0 %v389
        %v597 = vpop.f32.mrf.mxu0
        %v598 = vadd.f32 %v358, %v597
        %599 = vmatmul.f32.gmra.mxu0 %v392
        %v600 = vpop.f32.mrf.mxu0
        %v601 = vadd.f32 %v358, %v600
        %602 = vmatmul.f32.gmra.mxu0 %v395
        %v603 = vpop.f32.mrf.mxu0
        %v604 = vadd.f32 %v358, %v603
        %605 = vmatmul.f32.gmra.mxu0 %v398
        %v606 = vpop.f32.mrf.mxu0
        %v607 = vadd.f32 %v358, %v606
        %608 = vmatmul.f32.gmra.mxu0 %v401
        %v609 = vpop.f32.mrf.mxu0
        %v610 = vadd.f32 %v358, %v609
        %611 = vmatmul.f32.gmra.mxu0 %v404
        %v612 = vpop.f32.mrf.mxu0
        %v613 = vadd.f32 %v358, %v612
        %614 = vmatmul.f32.gmra.mxu0 %v407
        %v615 = vpop.f32.mrf.mxu0
        %v616 = vadd.f32 %v358, %v615
        %617 = vmatmul.f32.gmra.mxu0 %v410
        %v618 = vpop.f32.mrf.mxu0
        %v619 = vadd.f32 %v358, %v618
        %620 = vmatmul.f32.gmra.mxu0 %v413
        %v621 = vpop.f32.mrf.mxu0
        %v622 = vadd.f32 %v358, %v621
        %623 = vmatmul.f32.gmra.mxu0 %v416
        %v624 = vpop.f32.mrf.mxu0
        %v625 = vadd.f32 %v358, %v624
        %626 = vmatmul.f32.gmra.mxu0 %v419
        %v627 = vpop.f32.mrf.mxu0
        %v628 = vadd.f32 %v358, %v627
        %629 = vmatmul.f32.gmra.mxu0 %v422
        %v630 = vpop.f32.mrf.mxu0
        %v631 = vadd.f32 %v358, %v630
        %632 = vmatmul.f32.gmra.mxu0 %v425
        %v633 = vpop.f32.mrf.mxu0
        %v634 = vadd.f32 %v358, %v633
        %635 = vmatmul.f32.gmra.mxu0 %v428
        %v636 = vpop.f32.mrf.mxu0
        %v637 = vadd.f32 %v358, %v636
        %638 = vmatmul.f32.gmra.mxu0 %v431
        %v639 = vpop.f32.mrf.mxu0
        %v640 = vadd.f32 %v358, %v639
        %641 = vmatmul.f32.gmra.mxu0 %v434
        %v642 = vpop.f32.mrf.mxu0
        %v643 = vadd.f32 %v358, %v642
        %644 = vmatmul.f32.gmra.mxu0 %v437
        %v645 = vpop.f32.mrf.mxu0
        %v646 = vadd.f32 %v358, %v645
        %647 = vmatmul.f32.gmra.mxu0 %v440
        %v648 = vpop.f32.mrf.mxu0
        %v649 = vadd.f32 %v358, %v648
        %650 = vmatmul.f32.gmra.mxu0 %v443
        %v651 = vpop.f32.mrf.mxu0
        %v652 = vadd.f32 %v358, %v651
        %653 = vmatmul.f32.gmra.mxu0 %v446
        %v654 = vpop.f32.mrf.mxu0
        %v655 = vadd.f32 %v358, %v654
        %656 = vmatmul.f32.gmra.mxu0 %v449
        %v657 = vpop.f32.mrf.mxu0
        %v658 = vadd.f32 %v358, %v657
        %659 = vmatmul.f32.gmra.mxu0 %v452
        %v660 = vpop.f32.mrf.mxu0
        %v661 = vadd.f32 %v358, %v660
        %662 = vmatmul.f32.gmra.mxu0 %v455
        %v663 = vpop.f32.mrf.mxu0
        %v664 = vadd.f32 %v358, %v663
        %665 = vmatmul.f32.gmra.mxu0 %v458
        %v666 = vpop.f32.mrf.mxu0
        %v667 = vadd.f32 %v358, %v666
        %668 = vmatmul.f32.gmra.mxu0 %v461
        %v669 = vpop.f32.mrf.mxu0
        %v670 = vadd.f32 %v358, %v669
        %671 = vmatmul.f32.gmra.mxu0 %v464
        %v672 = vpop.f32.mrf.mxu0
        %v673 = vadd.f32 %v358, %v672
        %674 = vmatmul.f32.gmra.mxu0 %v467
        %v675 = vpop.f32.mrf.mxu0
        %v676 = vadd.f32 %v358, %v675
        %677 = vmatmul.f32.gmra.mxu0 %v470
        %v678 = vpop.f32.mrf.mxu0
        %v679 = vadd.f32 %v358, %v678
        %680 = vmatmul.f32.gmra.mxu0 %v473
        %v681 = vpop.f32.mrf.mxu0
        %v682 = vadd.f32 %v358, %v681
        %683 = vmatmul.f32.gmra.mxu0 %v476
        %v684 = vpop.f32.mrf.mxu0
        %v685 = vadd.f32 %v358, %v684
        %686 = vmatmul.f32.gmra.mxu0 %v479
        %v687 = vpop.f32.mrf.mxu0
        %v688 = vadd.f32 %v358, %v687
        %689 = vmatmul.f32.gmra.mxu0 %v482
        %v690 = vpop.f32.mrf.mxu0
        %v691 = vadd.f32 %v358, %v690
        %692 = vmatmul.f32.gmra.mxu0 %v485
        %v693 = vpop.f32.mrf.mxu0
        %v694 = vadd.f32 %v358, %v693
        %695 = vmatmul.f32.gmra.mxu0 %v488
        %v696 = vpop.f32.mrf.mxu0
        %v697 = vadd.f32 %v358, %v696
        %698 = vmatmul.f32.gmra.mxu0 %v491
        %v699 = vpop.f32.mrf.mxu0
        %v700 = vadd.f32 %v358, %v699
        %701 = vmatmul.f32.gmra.mxu0 %v494
        %v702 = vpop.f32.mrf.mxu0
        %v703 = vadd.f32 %v358, %v702
        %704 = vmatmul.f32.gmra.mxu0 %v497
        %v705 = vpop.f32.mrf.mxu0
        %v706 = vadd.f32 %v358, %v705
        %707 = vmatmul.f32.gmra.mxu0 %v500
        %v708 = vpop.f32.mrf.mxu0
        %v709 = vadd.f32 %v358, %v708
        %710 = vmatmul.f32.gmra.mxu0 %v503
        %v711 = vpop.f32.mrf.mxu0
        %v712 = vadd.f32 %v358, %v711
        %713 = vmatmul.f32.gmra.mxu0 %v506
        %v714 = vpop.f32.mrf.mxu0
        %v715 = vadd.f32 %v358, %v714
        %716 = vmatmul.f32.gmra.mxu0 %v509
        %v717 = vpop.f32.mrf.mxu0
        %v718 = vadd.f32 %v358, %v717
        %719 = vmatmul.f32.gmra.mxu0 %v512
        %v720 = vpop.f32.mrf.mxu0
        %v721 = vadd.f32 %v358, %v720
        %722 = vmatmul.f32.gmra.mxu0 %v515
        %v723 = vpop.f32.mrf.mxu0
        %v724 = vadd.f32 %v358, %v723
        %725 = vmatmul.f32.gmra.mxu0 %v518
        %v726 = vpop.f32.mrf.mxu0
        %v727 = vadd.f32 %v358, %v726
        %728 = vmatmul.f32.gmra.mxu0 %v521
        %v729 = vpop.f32.mrf.mxu0
        %v730 = vadd.f32 %v358, %v729
        %731 = vmatmul.f32.gmra.mxu0 %v524
        %v732 = vpop.f32.mrf.mxu0
        %v733 = vadd.f32 %v358, %v732
        %734 = vmatmul.f32.gmra.mxu0 %v527
        %v735 = vpop.f32.mrf.mxu0
        %v736 = vadd.f32 %v358, %v735
        %737 = vmatmul.f32.gmra.mxu0 %v530
        %v738 = vpop.f32.mrf.mxu0
        %v739 = vadd.f32 %v358, %v738
        %740 = vmatmul.f32.gmra.mxu0 %v533
        %v741 = vpop.f32.mrf.mxu0
        %v742 = vadd.f32 %v358, %v741
        %743 = vmatmul.f32.gmra.mxu0 %v536
        %v744 = vpop.f32.mrf.mxu0
        %v745 = vadd.f32 %v358, %v744
        %746 = vmatmul.f32.gmra.mxu0 %v539
        %v747 = vpop.f32.mrf.mxu0
        %v748 = vadd.f32 %v358, %v747
        %749 = vmatmul.f32.gmra.mxu0 %v542
        %v750 = vpop.f32.mrf.mxu0
        %v751 = vadd.f32 %v358, %v750
        %752 = vmatmul.f32.gmra.mxu0 %v545
        %v753 = vpop.f32.mrf.mxu0
        %v754 = vadd.f32 %v358, %v753
        %755 = vmatmul.f32.gmra.mxu0 %v548
        %v756 = vpop.f32.mrf.mxu0
        %v757 = vadd.f32 %v358, %v756
        %758 = vmatmul.f32.gmra.mxu0 %v551
        %v759 = vpop.f32.mrf.mxu0
        %v760 = vadd.f32 %v358, %v759
        %761 = vdwg.mxu0
        %v762 = vmax.f32 %v571, 0.0
        %v763 = vmax.f32 %v574, 0.0
        %v764 = vmax.f32 %v577, 0.0
        %v765 = vmax.f32 %v580, 0.0
        %v766 = vmax.f32 %v583, 0.0
        %v767 = vmax.f32 %v586, 0.0
        %v768 = vmax.f32 %v589, 0.0
        %v769 = vmax.f32 %v592, 0.0
        %v770 = vmax.f32 %v595, 0.0
        %v771 = vmax.f32 %v598, 0.0
        %v772 = vmax.f32 %v601, 0.0
        %v773 = vmax.f32 %v604, 0.0
        %v774 = vmax.f32 %v607, 0.0
        %v775 = vmax.f32 %v610, 0.0
        %v776 = vmax.f32 %v613, 0.0
        %v777 = vmax.f32 %v616, 0.0
        %v778 = vmax.f32 %v619, 0.0
        %v779 = vmax.f32 %v622, 0.0
        %v780 = vmax.f32 %v625, 0.0
        %v781 = vmax.f32 %v628, 0.0
        %v782 = vmax.f32 %v631, 0.0
        %v783 = vmax.f32 %v634, 0.0
        %v784 = vmax.f32 %v637, 0.0
        %v785 = vmax.f32 %v640, 0.0
        %v786 = vmax.f32 %v643, 0.0
        %v787 = vmax.f32 %v646, 0.0
        %v788 = vmax.f32 %v649, 0.0
        %v789 = vmax.f32 %v652, 0.0
        %v790 = vmax.f32 %v655, 0.0
        %v791 = vmax.f32 %v658, 0.0
        %v792 = vmax.f32 %v661, 0.0
        %v793 = vmax.f32 %v664, 0.0
        %v794 = vmax.f32 %v667, 0.0
        %v795 = vmax.f32 %v670, 0.0
        %v796 = vmax.f32 %v673, 0.0
        %v797 = vmax.f32 %v676, 0.0
        %v798 = vmax.f32 %v679, 0.0
        %v799 = vmax.f32 %v682, 0.0
        %v800 = vmax.f32 %v685, 0.0
        %v801 = vmax.f32 %v688, 0.0
        %v802 = vmax.f32 %v691, 0.0
        %v803 = vmax.f32 %v694, 0.0
        %v804 = vmax.f32 %v697, 0.0
        %v805 = vmax.f32 %v700, 0.0
        %v806 = vmax.f32 %v703, 0.0
        %v807 = vmax.f32 %v706, 0.0
        %v808 = vmax.f32 %v709, 0.0
        %v809 = vmax.f32 %v712, 0.0
        %v810 = vmax.f32 %v715, 0.0
        %v811 = vmax.f32 %v718, 0.0
        %v812 = vmax.f32 %v721, 0.0
        %v813 = vmax.f32 %v724, 0.0
        %v814 = vmax.f32 %v727, 0.0
        %v815 = vmax.f32 %v730, 0.0
        %v816 = vmax.f32 %v733, 0.0
        %v817 = vmax.f32 %v736, 0.0
        %v818 = vmax.f32 %v739, 0.0
        %v819 = vmax.f32 %v742, 0.0
        %v820 = vmax.f32 %v745, 0.0
        %v821 = vmax.f32 %v748, 0.0
        %v822 = vmax.f32 %v751, 0.0
        %v823 = vmax.f32 %v754, 0.0
        %v824 = vmax.f32 %v757, 0.0
        %v825 = vmax.f32 %v760, 0.0
        %vm826 = vcmask 261120
        %v827 = vsel %vm826, %v762, 0.0
        %828 = vadd.xlane.f32.xlu0 %v827
        %v829 = vpop.xlane.xlu0 %828
        %v830 = vsel %vm826, %v763, 0.0
        %831 = vadd.xlane.f32.xlu0 %v830
        %v832 = vpop.xlane.xlu0 %831
        %v833 = vsel %vm826, %v764, 0.0
        %834 = vadd.xlane.f32.xlu0 %v833
        %v835 = vpop.xlane.xlu0 %834
        %v836 = vsel %vm826, %v765, 0.0
        %837 = vadd.xlane.f32.xlu0 %v836
        %v838 = vpop.xlane.xlu0 %837
        %v839 = vsel %vm826, %v766, 0.0
        %840 = vadd.xlane.f32.xlu0 %v839
        %v841 = vpop.xlane.xlu0 %840
        %v842 = vsel %vm826, %v767, 0.0
        %843 = vadd.xlane.f32.xlu0 %v842
        %v844 = vpop.xlane.xlu0 %843
        %v845 = vsel %vm826, %v768, 0.0
        %846 = vadd.xlane.f32.xlu0 %v845
        %v847 = vpop.xlane.xlu0 %846
        %v848 = vsel %vm826, %v769, 0.0
        %849 = vadd.xlane.f32.xlu0 %v848
        %v850 = vpop.xlane.xlu0 %849
        %v851 = vsel %vm826, %v770, 0.0
        %852 = vadd.xlane.f32.xlu0 %v851
        %v853 = vpop.xlane.xlu0 %852
        %v854 = vsel %vm826, %v771, 0.0
        %855 = vadd.xlane.f32.xlu0 %v854
        %v856 = vpop.xlane.xlu0 %855
        %v857 = vsel %vm826, %v772, 0.0
        %858 = vadd.xlane.f32.xlu0 %v857
        %v859 = vpop.xlane.xlu0 %858
        %v860 = vsel %vm826, %v773, 0.0
        %861 = vadd.xlane.f32.xlu0 %v860
        %v862 = vpop.xlane.xlu0 %861
        %v863 = vsel %vm826, %v774, 0.0
        %864 = vadd.xlane.f32.xlu0 %v863
        %v865 = vpop.xlane.xlu0 %864
        %v866 = vsel %vm826, %v775, 0.0
        %867 = vadd.xlane.f32.xlu0 %v866
        %v868 = vpop.xlane.xlu0 %867
        %v869 = vsel %vm826, %v776, 0.0
        %870 = vadd.xlane.f32.xlu0 %v869
        %v871 = vpop.xlane.xlu0 %870
        %v872 = vsel %vm826, %v777, 0.0
        %873 = vadd.xlane.f32.xlu0 %v872
        %v874 = vpop.xlane.xlu0 %873
        %v875 = vsel %vm826, %v778, 0.0
        %876 = vadd.xlane.f32.xlu0 %v875
        %v877 = vpop.xlane.xlu0 %876
        %v878 = vsel %vm826, %v779, 0.0
        %879 = vadd.xlane.f32.xlu0 %v878
        %v880 = vpop.xlane.xlu0 %879
        %v881 = vsel %vm826, %v780, 0.0
        %882 = vadd.xlane.f32.xlu0 %v881
        %v883 = vpop.xlane.xlu0 %882
        %v884 = vsel %vm826, %v781, 0.0
        %885 = vadd.xlane.f32.xlu0 %v884
        %v886 = vpop.xlane.xlu0 %885
        %v887 = vsel %vm826, %v782, 0.0
        %888 = vadd.xlane.f32.xlu0 %v887
        %v889 = vpop.xlane.xlu0 %888
        %v890 = vsel %vm826, %v783, 0.0
        %891 = vadd.xlane.f32.xlu0 %v890
        %v892 = vpop.xlane.xlu0 %891
        %v893 = vsel %vm826, %v784, 0.0
        %894 = vadd.xlane.f32.xlu0 %v893
        %v895 = vpop.xlane.xlu0 %894
        %v896 = vsel %vm826, %v785, 0.0
        %897 = vadd.xlane.f32.xlu0 %v896
        %v898 = vpop.xlane.xlu0 %897
        %v899 = vsel %vm826, %v786, 0.0
        %900 = vadd.xlane.f32.xlu0 %v899
        %v901 = vpop.xlane.xlu0 %900
        %v902 = vsel %vm826, %v787, 0.0
        %903 = vadd.xlane.f32.xlu0 %v902
        %v904 = vpop.xlane.xlu0 %903
        %v905 = vsel %vm826, %v788, 0.0
        %906 = vadd.xlane.f32.xlu0 %v905
        %v907 = vpop.xlane.xlu0 %906
        %v908 = vsel %vm826, %v789, 0.0
        %909 = vadd.xlane.f32.xlu0 %v908
        %v910 = vpop.xlane.xlu0 %909
        %v911 = vsel %vm826, %v790, 0.0
        %912 = vadd.xlane.f32.xlu0 %v911
        %v913 = vpop.xlane.xlu0 %912
        %v914 = vsel %vm826, %v791, 0.0
        %915 = vadd.xlane.f32.xlu0 %v914
        %v916 = vpop.xlane.xlu0 %915
        %v917 = vsel %vm826, %v792, 0.0
        %918 = vadd.xlane.f32.xlu0 %v917
        %v919 = vpop.xlane.xlu0 %918
        %v920 = vsel %vm826, %v793, 0.0
        %921 = vadd.xlane.f32.xlu0 %v920
        %v922 = vpop.xlane.xlu0 %921
        %v923 = vsel %vm826, %v794, 0.0
        %924 = vadd.xlane.f32.xlu0 %v923
        %v925 = vpop.xlane.xlu0 %924
        %v926 = vsel %vm826, %v795, 0.0
        %927 = vadd.xlane.f32.xlu0 %v926
        %v928 = vpop.xlane.xlu0 %927
        %v929 = vsel %vm826, %v796, 0.0
        %930 = vadd.xlane.f32.xlu0 %v929
        %v931 = vpop.xlane.xlu0 %930
        %v932 = vsel %vm826, %v797, 0.0
        %933 = vadd.xlane.f32.xlu0 %v932
        %v934 = vpop.xlane.xlu0 %933
        %v935 = vsel %vm826, %v798, 0.0
        %936 = vadd.xlane.f32.xlu0 %v935
        %v937 = vpop.xlane.xlu0 %936
        %v938 = vsel %vm826, %v799, 0.0
        %939 = vadd.xlane.f32.xlu0 %v938
        %v940 = vpop.xlane.xlu0 %939
        %v941 = vsel %vm826, %v800, 0.0
        %942 = vadd.xlane.f32.xlu0 %v941
        %v943 = vpop.xlane.xlu0 %942
        %v944 = vsel %vm826, %v801, 0.0
        %945 = vadd.xlane.f32.xlu0 %v944
        %v946 = vpop.xlane.xlu0 %945
        %v947 = vsel %vm826, %v802, 0.0
        %948 = vadd.xlane.f32.xlu0 %v947
        %v949 = vpop.xlane.xlu0 %948
        %v950 = vsel %vm826, %v803, 0.0
        %951 = vadd.xlane.f32.xlu0 %v950
        %v952 = vpop.xlane.xlu0 %951
        %v953 = vsel %vm826, %v804, 0.0
        %954 = vadd.xlane.f32.xlu0 %v953
        %v955 = vpop.xlane.xlu0 %954
        %v956 = vsel %vm826, %v805, 0.0
        %957 = vadd.xlane.f32.xlu0 %v956
        %v958 = vpop.xlane.xlu0 %957
        %v959 = vsel %vm826, %v806, 0.0
        %960 = vadd.xlane.f32.xlu0 %v959
        %v961 = vpop.xlane.xlu0 %960
        %v962 = vsel %vm826, %v807, 0.0
        %963 = vadd.xlane.f32.xlu0 %v962
        %v964 = vpop.xlane.xlu0 %963
        %v965 = vsel %vm826, %v808, 0.0
        %966 = vadd.xlane.f32.xlu0 %v965
        %v967 = vpop.xlane.xlu0 %966
        %v968 = vsel %vm826, %v809, 0.0
        %969 = vadd.xlane.f32.xlu0 %v968
        %v970 = vpop.xlane.xlu0 %969
        %v971 = vsel %vm826, %v810, 0.0
        %972 = vadd.xlane.f32.xlu0 %v971
        %v973 = vpop.xlane.xlu0 %972
        %v974 = vsel %vm826, %v811, 0.0
        %975 = vadd.xlane.f32.xlu0 %v974
        %v976 = vpop.xlane.xlu0 %975
        %v977 = vsel %vm826, %v812, 0.0
        %978 = vadd.xlane.f32.xlu0 %v977
        %v979 = vpop.xlane.xlu0 %978
        %v980 = vsel %vm826, %v813, 0.0
        %981 = vadd.xlane.f32.xlu0 %v980
        %v982 = vpop.xlane.xlu0 %981
        %v983 = vsel %vm826, %v814, 0.0
        %984 = vadd.xlane.f32.xlu0 %v983
        %v985 = vpop.xlane.xlu0 %984
        %v986 = vsel %vm826, %v815, 0.0
        %987 = vadd.xlane.f32.xlu0 %v986
        %v988 = vpop.xlane.xlu0 %987
        %v989 = vsel %vm826, %v816, 0.0
        %990 = vadd.xlane.f32.xlu0 %v989
        %v991 = vpop.xlane.xlu0 %990
        %v992 = vsel %vm826, %v817, 0.0
        %993 = vadd.xlane.f32.xlu0 %v992
        %v994 = vpop.xlane.xlu0 %993
        %v995 = vsel %vm826, %v818, 0.0
        %996 = vadd.xlane.f32.xlu0 %v995
        %v997 = vpop.xlane.xlu0 %996
        %v998 = vsel %vm826, %v819, 0.0
        %999 = vadd.xlane.f32.xlu0 %v998
        %v1000 = vpop.xlane.xlu0 %999
        %v1001 = vsel %vm826, %v820, 0.0
        %1002 = vadd.xlane.f32.xlu0 %v1001
        %v1003 = vpop.xlane.xlu0 %1002
        %v1004 = vsel %vm826, %v821, 0.0
        %1005 = vadd.xlane.f32.xlu0 %v1004
        %v1006 = vpop.xlane.xlu0 %1005
        %v1007 = vsel %vm826, %v822, 0.0
        %1008 = vadd.xlane.f32.xlu0 %v1007
        %v1009 = vpop.xlane.xlu0 %1008
        %v1010 = vsel %vm826, %v823, 0.0
        %1011 = vadd.xlane.f32.xlu0 %v1010
        %v1012 = vpop.xlane.xlu0 %1011
        %v1013 = vsel %vm826, %v824, 0.0
        %1014 = vadd.xlane.f32.xlu0 %v1013
        %v1015 = vpop.xlane.xlu0 %1014
        %v1016 = vsel %vm826, %v825, 0.0
        %1017 = vadd.xlane.f32.xlu0 %v1016
        %v1018 = vpop.xlane.xlu0 %1017
        %v1019 = vrcp.pop 32.0
        %v1020 = vmul.f32 32.0, %v1019
        %v1021 = vsub.f32 1.0, %v1020
        %v1022 = vmul.f32 %v1019, %v1021
        %v1023 = vadd.f32 %v1019, %v1022
        %vm1024 = vweird.f32 %v1019
        %v1025 = vsel %vm1024, %v1019, %v1023
        %v1026 = vmul.f32 %v829, %v1025
        %v1027 = vmul.f32 %v832, %v1025
        %v1028 = vmul.f32 %v835, %v1025
        %v1029 = vmul.f32 %v838, %v1025
        %v1030 = vmul.f32 %v841, %v1025
        %v1031 = vmul.f32 %v844, %v1025
        %v1032 = vmul.f32 %v847, %v1025
        %v1033 = vmul.f32 %v850, %v1025
        %v1034 = vmul.f32 %v853, %v1025
        %v1035 = vmul.f32 %v856, %v1025
        %v1036 = vmul.f32 %v859, %v1025
        %v1037 = vmul.f32 %v862, %v1025
        %v1038 = vmul.f32 %v865, %v1025
        %v1039 = vmul.f32 %v868, %v1025
        %v1040 = vmul.f32 %v871, %v1025
        %v1041 = vmul.f32 %v874, %v1025
        %v1042 = vmul.f32 %v877, %v1025
        %v1043 = vmul.f32 %v880, %v1025
        %v1044 = vmul.f32 %v883, %v1025
        %v1045 = vmul.f32 %v886, %v1025
        %v1046 = vmul.f32 %v889, %v1025
        %v1047 = vmul.f32 %v892, %v1025
        %v1048 = vmul.f32 %v895, %v1025
        %v1049 = vmul.f32 %v898, %v1025
        %v1050 = vmul.f32 %v901, %v1025
        %v1051 = vmul.f32 %v904, %v1025
        %v1052 = vmul.f32 %v907, %v1025
        %v1053 = vmul.f32 %v910, %v1025
        %v1054 = vmul.f32 %v913, %v1025
        %v1055 = vmul.f32 %v916, %v1025
        %v1056 = vmul.f32 %v919, %v1025
        %v1057 = vmul.f32 %v922, %v1025
        %v1058 = vmul.f32 %v925, %v1025
        %v1059 = vmul.f32 %v928, %v1025
        %v1060 = vmul.f32 %v931, %v1025
        %v1061 = vmul.f32 %v934, %v1025
        %v1062 = vmul.f32 %v937, %v1025
        %v1063 = vmul.f32 %v940, %v1025
        %v1064 = vmul.f32 %v943, %v1025
        %v1065 = vmul.f32 %v946, %v1025
        %v1066 = vmul.f32 %v949, %v1025
        %v1067 = vmul.f32 %v952, %v1025
        %v1068 = vmul.f32 %v955, %v1025
        %v1069 = vmul.f32 %v958, %v1025
        %v1070 = vmul.f32 %v961, %v1025
        %v1071 = vmul.f32 %v964, %v1025
        %v1072 = vmul.f32 %v967, %v1025
        %v1073 = vmul.f32 %v970, %v1025
        %v1074 = vmul.f32 %v973, %v1025
        %v1075 = vmul.f32 %v976, %v1025
        %v1076 = vmul.f32 %v979, %v1025
        %v1077 = vmul.f32 %v982, %v1025
        %v1078 = vmul.f32 %v985, %v1025
        %v1079 = vmul.f32 %v988, %v1025
        %v1080 = vmul.f32 %v991, %v1025
        %v1081 = vmul.f32 %v994, %v1025
        %v1082 = vmul.f32 %v997, %v1025
        %v1083 = vmul.f32 %v1000, %v1025
        %v1084 = vmul.f32 %v1003, %v1025
        %v1085 = vmul.f32 %v1006, %v1025
        %v1086 = vmul.f32 %v1009, %v1025
        %v1087 = vmul.f32 %v1012, %v1025
        %v1088 = vmul.f32 %v1015, %v1025
        %v1089 = vmul.f32 %v1018, %v1025
        %v1154 = vlaneseq
        %v1155 = vand.u32 %v1154, 127
        %v1156 = vperm.slane %v1026, %v1155
        %v1157 = vadd.s32 %v1155, 4294967288
        %v1158 = vperm.slane %v1027, %v1157
        %vm1159 = vcmask 130112
        %v1160 = vsel %vm1159, %v1158, %v1156
        %v1161 = vadd.s32 %v1155, 4294967280
        %v1162 = vperm.slane %v1028, %v1161
        %vm1163 = vcmask 195712
        %v1164 = vsel %vm1163, %v1162, %v1160
        %v1165 = vadd.s32 %v1155, 4294967272
        %v1166 = vperm.slane %v1029, %v1165
        %vm1167 = vcmask 261312
        %v1168 = vsel %vm1167, %v1166, %v1164
        %v1169 = vadd.s32 %v1155, 4294967264
        %v1170 = vperm.slane %v1030, %v1169
        %vm1171 = vcmask 326912
        %v1172 = vsel %vm1171, %v1170, %v1168
        %v1173 = vadd.s32 %v1155, 4294967256
        %v1174 = vperm.slane %v1031, %v1173
        %vm1175 = vcmask 392512
        %v1176 = vsel %vm1175, %v1174, %v1172
        %v1177 = vadd.s32 %v1155, 4294967248
        %v1178 = vperm.slane %v1032, %v1177
        %vm1179 = vcmask 458112
        %v1180 = vsel %vm1179, %v1178, %v1176
        %v1181 = vadd.s32 %v1155, 4294967240
        %v1182 = vperm.slane %v1033, %v1181
        %vm1183 = vcmask 523712
        %v1184 = vsel %vm1183, %v1182, %v1180
        %v1185 = vperm.slane %v1034, %v1155
        %v1186 = vperm.slane %v1035, %v1157
        %v1187 = vsel %vm1159, %v1186, %v1185
        %v1188 = vperm.slane %v1036, %v1161
        %v1189 = vsel %vm1163, %v1188, %v1187
        %v1190 = vperm.slane %v1037, %v1165
        %v1191 = vsel %vm1167, %v1190, %v1189
        %v1192 = vperm.slane %v1038, %v1169
        %v1193 = vsel %vm1171, %v1192, %v1191
        %v1194 = vperm.slane %v1039, %v1173
        %v1195 = vsel %vm1175, %v1194, %v1193
        %v1196 = vperm.slane %v1040, %v1177
        %v1197 = vsel %vm1179, %v1196, %v1195
        %v1198 = vperm.slane %v1041, %v1181
        %v1199 = vsel %vm1183, %v1198, %v1197
        %v1200 = vperm.slane %v1042, %v1155
        %v1201 = vperm.slane %v1043, %v1157
        %v1202 = vsel %vm1159, %v1201, %v1200
        %v1203 = vperm.slane %v1044, %v1161
        %v1204 = vsel %vm1163, %v1203, %v1202
        %v1205 = vperm.slane %v1045, %v1165
        %v1206 = vsel %vm1167, %v1205, %v1204
        %v1207 = vperm.slane %v1046, %v1169
        %v1208 = vsel %vm1171, %v1207, %v1206
        %v1209 = vperm.slane %v1047, %v1173
        %v1210 = vsel %vm1175, %v1209, %v1208
        %v1211 = vperm.slane %v1048, %v1177
        %v1212 = vsel %vm1179, %v1211, %v1210
        %v1213 = vperm.slane %v1049, %v1181
        %v1214 = vsel %vm1183, %v1213, %v1212
        %v1215 = vperm.slane %v1050, %v1155
        %v1216 = vperm.slane %v1051, %v1157
        %v1217 = vsel %vm1159, %v1216, %v1215
        %v1218 = vperm.slane %v1052, %v1161
        %v1219 = vsel %vm1163, %v1218, %v1217
        %v1220 = vperm.slane %v1053, %v1165
        %v1221 = vsel %vm1167, %v1220, %v1219
        %v1222 = vperm.slane %v1054, %v1169
        %v1223 = vsel %vm1171, %v1222, %v1221
        %v1224 = vperm.slane %v1055, %v1173
        %v1225 = vsel %vm1175, %v1224, %v1223
        %v1226 = vperm.slane %v1056, %v1177
        %v1227 = vsel %vm1179, %v1226, %v1225
        %v1228 = vperm.slane %v1057, %v1181
        %v1229 = vsel %vm1183, %v1228, %v1227
        %v1230 = vperm.slane %v1058, %v1155
        %v1231 = vperm.slane %v1059, %v1157
        %v1232 = vsel %vm1159, %v1231, %v1230
        %v1233 = vperm.slane %v1060, %v1161
        %v1234 = vsel %vm1163, %v1233, %v1232
        %v1235 = vperm.slane %v1061, %v1165
        %v1236 = vsel %vm1167, %v1235, %v1234
        %v1237 = vperm.slane %v1062, %v1169
        %v1238 = vsel %vm1171, %v1237, %v1236
        %v1239 = vperm.slane %v1063, %v1173
        %v1240 = vsel %vm1175, %v1239, %v1238
        %v1241 = vperm.slane %v1064, %v1177
        %v1242 = vsel %vm1179, %v1241, %v1240
        %v1243 = vperm.slane %v1065, %v1181
        %v1244 = vsel %vm1183, %v1243, %v1242
        %v1245 = vperm.slane %v1066, %v1155
        %v1246 = vperm.slane %v1067, %v1157
        %v1247 = vsel %vm1159, %v1246, %v1245
        %v1248 = vperm.slane %v1068, %v1161
        %v1249 = vsel %vm1163, %v1248, %v1247
        %v1250 = vperm.slane %v1069, %v1165
        %v1251 = vsel %vm1167, %v1250, %v1249
        %v1252 = vperm.slane %v1070, %v1169
        %v1253 = vsel %vm1171, %v1252, %v1251
        %v1254 = vperm.slane %v1071, %v1173
        %v1255 = vsel %vm1175, %v1254, %v1253
        %v1256 = vperm.slane %v1072, %v1177
        %v1257 = vsel %vm1179, %v1256, %v1255
        %v1258 = vperm.slane %v1073, %v1181
        %v1259 = vsel %vm1183, %v1258, %v1257
        %v1260 = vperm.slane %v1074, %v1155
        %v1261 = vperm.slane %v1075, %v1157
        %v1262 = vsel %vm1159, %v1261, %v1260
        %v1263 = vperm.slane %v1076, %v1161
        %v1264 = vsel %vm1163, %v1263, %v1262
        %v1265 = vperm.slane %v1077, %v1165
        %v1266 = vsel %vm1167, %v1265, %v1264
        %v1267 = vperm.slane %v1078, %v1169
        %v1268 = vsel %vm1171, %v1267, %v1266
        %v1269 = vperm.slane %v1079, %v1173
        %v1270 = vsel %vm1175, %v1269, %v1268
        %v1271 = vperm.slane %v1080, %v1177
        %v1272 = vsel %vm1179, %v1271, %v1270
        %v1273 = vperm.slane %v1081, %v1181
        %v1274 = vsel %vm1183, %v1273, %v1272
        %v1275 = vperm.slane %v1082, %v1155
        %v1276 = vperm.slane %v1083, %v1157
        %v1277 = vsel %vm1159, %v1276, %v1275
        %v1278 = vperm.slane %v1084, %v1161
        %v1279 = vsel %vm1163, %v1278, %v1277
        %v1280 = vperm.slane %v1085, %v1165
        %v1281 = vsel %vm1167, %v1280, %v1279
        %v1282 = vperm.slane %v1086, %v1169
        %v1283 = vsel %vm1171, %v1282, %v1281
        %v1284 = vperm.slane %v1087, %v1173
        %v1285 = vsel %vm1175, %v1284, %v1283
        %v1286 = vperm.slane %v1088, %v1177
        %v1287 = vsel %vm1179, %v1286, %v1285
        %v1288 = vperm.slane %v1089, %v1181
        %v1289 = vsel %vm1183, %v1288, %v1287
        %vm1290 = vcmask 1041409
        %v1291 = vsel %vm1290, %v1199, %v1184
        %vm1292 = vcmask 1042434
        %v1293 = vsel %vm1292, %v1214, %v1291
        %vm1294 = vcmask 1043459
        %v1295 = vsel %vm1294, %v1229, %v1293
        %vm1296 = vcmask 1044484
        %v1297 = vsel %vm1296, %v1244, %v1295
        %vm1298 = vcmask 1045509
        %v1299 = vsel %vm1298, %v1259, %v1297
        %vm1300 = vcmask 1046534
        %v1301 = vsel %vm1300, %v1274, %v1299
        %vm1302 = vcmask 1047559
        %v1303 = vsel %vm1302, %v1289, %v1301
        %v1305 = vsel %vm360, %v1303, 0.0
        %1306 = vadd.xlane.f32.xlu0 %v1305
        %v1307 = vpop.xlane.xlu0 %1306
        %v1308 = vrcp.pop 64.0
        %v1309 = vmul.f32 64.0, %v1308
        %v1310 = vsub.f32 1.0, %v1309
        %v1311 = vmul.f32 %v1308, %v1310
        %v1312 = vadd.f32 %v1308, %v1311
        %vm1313 = vweird.f32 %v1308
        %v1314 = vsel %vm1313, %v1308, %v1312
        %v1315 = vmul.f32 %v1307, %v1314
        %v1316 = vld [vmem:[%s3] sm:$0xff]
        %v1318 = vperm.slane %v1315, %v1155
        %vm1319 = vcmask 64512
        %v1320 = vsel %vm1319, %v1318, 0
        %1322 = vmatpush.msra.mxu0 0.0
        %1323 = vmatpush.msra.mxu0 0.0
        %1324 = vmatpush.msra.mxu0 0.0
        %1325 = vmatpush.msra.mxu0 0.0
        %1326 = vmatpush.msra.mxu0 0.0
        %1327 = vmatpush.msra.mxu0 0.0
        %1328 = vmatpush.msra.mxu0 0.0
        %1329 = vmatpush.msra.mxu0 0.0
        %1330 = vmatpush.msra.mxu0 0.0
        %1331 = vmatpush.msra.mxu0 0.0
        %1332 = vmatpush.msra.mxu0 0.0
        %1333 = vmatpush.msra.mxu0 0.0
        %1334 = vmatpush.msra.mxu0 0.0
        %1335 = vmatpush.msra.mxu0 0.0
        %1336 = vmatpush.msra.mxu0 0.0
        %1337 = vmatpush.msra.mxu0 %v1316
        %1338 = vmatmul.f32.gmra.mxu0 %v1320
        %v1339 = vpop.f32.mrf.mxu0
        %v1340 = vadd.f32 0.0, %v1339
        %1341 = vdwg.mxu0
        %v1342 = vmax.f32 %v1340, 0.0
        %v1343 = vld [vmem:[%s4] sm:$0xf]
        %vm1344 = vcmask 31744
        %v1346 = vsel %vm1344, %v1342, 0
        %vm1348 = vcmask 1043456
        %v1350 = vsel %vm1348, %v1343, 0
        %1352 = vmatpush.msra.mxu0 0.0
        %1353 = vmatpush.msra.mxu0 0.0
        %1354 = vmatpush.msra.mxu0 0.0
        %1355 = vmatpush.msra.mxu0 0.0
        %1356 = vmatpush.msra.mxu0 0.0
        %1357 = vmatpush.msra.mxu0 0.0
        %1358 = vmatpush.msra.mxu0 0.0
        %1359 = vmatpush.msra.mxu0 0.0
        %1360 = vmatpush.msra.mxu0 0.0
        %1361 = vmatpush.msra.mxu0 0.0
        %1362 = vmatpush.msra.mxu0 0.0
        %1363 = vmatpush.msra.mxu0 0.0
        %1364 = vmatpush.msra.mxu0 0.0
        %1365 = vmatpush.msra.mxu0 0.0
        %1366 = vmatpush.msra.mxu0 0.0
        %1367 = vmatpush.msra.mxu0 %v1350
        %1368 = vmatmul.f32.gmra.mxu0 %v1346
        %v1369 = vpop.f32.mrf.mxu0
        %v1370 = vadd.f32 0.0, %v1369
        %1371 = vdwg.mxu0
        %vm1372 = vcmask 57344
        %v1373 = vsel %vm1372, %v1370, -inf
        %1374 = vmax.xlane.f32.xlu0 %v1373
        %v1375 = vpop.xlane.xlu0 %1374
        %v1376 = vsub.f32 %v1370, %v1375
        %v1377 = vmul.f32 %v1376, 1.442695
        %v1378 = vpow.pop %v1377
        %v1379 = vsel %vm1372, %v1378, 0.0
        %1380 = vadd.xlane.f32.xlu0 %v1379
        %v1381 = vpop.xlane.xlu0 %1380
        %v1382 = vrcp.pop %v1381
        %v1383 = vmul.f32 %v1381, %v1382
        %v1384 = vsub.f32 1.0, %v1383
        %v1385 = vmul.f32 %v1382, %v1384
        %v1386 = vadd.f32 %v1382, %v1385
        %vm1387 = vweird.f32 %v1381
        %vm1388 = vweird.f32 %v1382
        %vm1389 = vmor %vm1387, %vm1388
        %v1390 = vsel %vm1389, %v1382, %v1386
        %v1391 = vand.u32 2147483647, %v1381
        %vm1392 = vcmp.eq.f32.partialorder %v1391, 8.507059e+37
        %v1393 = vand.u32 %v1381, 2147483648
        %v1394 = vor.u32 1.1754944e-38, %v1393
        %v1395 = vsel %vm1392, %v1394, %v1390
        %v1396 = vmul.f32 %v1378, %v1395
        %1397 = vst.msk [vmem:[%s278] sm:$0x1] %vm1372, %v1396
        %v1398 = vperm.slane %v1396, 0
        %v1399 = vlaneseq
        %v1400 = vshrl.u32 %v1399, 7
        %1402 = vset.pattern.permute.xlu0 %v1400
        %1403 = vperm.xlu0 %1402, %v1398
        %v1404 = vpop.permute.xlu0 %1403
        %v1405 = vperm.slane %v1404, 0
        %v1406 = vperm.slane %v1404, 1
        %v1407 = vperm.slane %v1404, 2
        %v1408 = vperm.slane %v1404, 3
        %v1409 = vperm.slane %v1404, 4
        %v1410 = vperm.slane %v1404, 5
        %v1411 = vperm.slane %v1404, 6
        %v1412 = vperm.slane %v1404, 7
        %v1413 = vmul.f32 %v762, %v1405
        %v1414 = vmul.f32 %v763, %v1405
        %v1415 = vmul.f32 %v764, %v1405
        %v1416 = vmul.f32 %v765, %v1405
        %v1417 = vmul.f32 %v766, %v1405
        %v1418 = vmul.f32 %v767, %v1405
        %v1419 = vmul.f32 %v768, %v1405
        %v1420 = vmul.f32 %v769, %v1405
        %v1421 = vmul.f32 %v770, %v1406
        %v1422 = vmul.f32 %v771, %v1406
        %v1423 = vmul.f32 %v772, %v1406
        %v1424 = vmul.f32 %v773, %v1406
        %v1425 = vmul.f32 %v774, %v1406
        %v1426 = vmul.f32 %v775, %v1406
        %v1427 = vmul.f32 %v776, %v1406
        %v1428 = vmul.f32 %v777, %v1406
        %v1429 = vmul.f32 %v778, %v1407
        %v1430 = vmul.f32 %v779, %v1407
        %v1431 = vmul.f32 %v780, %v1407
        %v1432 = vmul.f32 %v781, %v1407
        %v1433 = vmul.f32 %v782, %v1407
        %v1434 = vmul.f32 %v783, %v1407
        %v1435 = vmul.f32 %v784, %v1407
        %v1436 = vmul.f32 %v785, %v1407
        %v1437 = vmul.f32 %v786, %v1408
        %v1438 = vmul.f32 %v787, %v1408
        %v1439 = vmul.f32 %v788, %v1408
        %v1440 = vmul.f32 %v789, %v1408
        %v1441 = vmul.f32 %v790, %v1408
        %v1442 = vmul.f32 %v791, %v1408
        %v1443 = vmul.f32 %v792, %v1408
        %v1444 = vmul.f32 %v793, %v1408
        %v1445 = vmul.f32 %v794, %v1409
        %v1446 = vmul.f32 %v795, %v1409
        %v1447 = vmul.f32 %v796, %v1409
        %v1448 = vmul.f32 %v797, %v1409
        %v1449 = vmul.f32 %v798, %v1409
        %v1450 = vmul.f32 %v799, %v1409
        %v1451 = vmul.f32 %v800, %v1409
        %v1452 = vmul.f32 %v801, %v1409
        %v1453 = vmul.f32 %v802, %v1410
        %v1454 = vmul.f32 %v803, %v1410
        %v1455 = vmul.f32 %v804, %v1410
        %v1456 = vmul.f32 %v805, %v1410
        %v1457 = vmul.f32 %v806, %v1410
        %v1458 = vmul.f32 %v807, %v1410
        %v1459 = vmul.f32 %v808, %v1410
        %v1460 = vmul.f32 %v809, %v1410
        %v1461 = vmul.f32 %v810, %v1411
        %v1462 = vmul.f32 %v811, %v1411
        %v1463 = vmul.f32 %v812, %v1411
        %v1464 = vmul.f32 %v813, %v1411
        %v1465 = vmul.f32 %v814, %v1411
        %v1466 = vmul.f32 %v815, %v1411
        %v1467 = vmul.f32 %v816, %v1411
        %v1468 = vmul.f32 %v817, %v1411
        %v1469 = vmul.f32 %v818, %v1412
        %v1470 = vmul.f32 %v819, %v1412
        %v1471 = vmul.f32 %v820, %v1412
        %v1472 = vmul.f32 %v821, %v1412
        %v1473 = vmul.f32 %v822, %v1412
        %v1474 = vmul.f32 %v823, %v1412
        %v1475 = vmul.f32 %v824, %v1412
        %v1476 = vmul.f32 %v825, %v1412
        %1477 = vxpose.xlu0.b32.start [1/16] %v1413, 128
        %1478 = vxpose.xlu0.b32.cont [2/16] %v1414, 128
        %1479 = vxpose.xlu0.b32.cont [3/16] %v1415, 128
        %1480 = vxpose.xlu0.b32.cont [4/16] %v1416, 128
        %1481 = vxpose.xlu0.b32.cont [5/16] %v1417, 128
        %1482 = vxpose.xlu0.b32.cont [6/16] %v1418, 128
        %1483 = vxpose.xlu0.b32.cont [7/16] %v1419, 128
        %1484 = vxpose.xlu0.b32.cont [8/16] %v1420, 128
        %1485 = vxpose.xlu0.b32.cont [9/16] %v1421, 128
        %1486 = vxpose.xlu0.b32.cont [10/16] %v1422, 128
        %1487 = vxpose.xlu0.b32.cont [11/16] %v1423, 128
        %1488 = vxpose.xlu0.b32.cont [12/16] %v1424, 128
        %1489 = vxpose.xlu0.b32.cont [13/16] %v1425, 128
        %1490 = vxpose.xlu0.b32.cont [14/16] %v1426, 128
        %1491 = vxpose.xlu0.b32.cont [15/16] %v1427, 128
        %1492 = vxpose.xlu0.b32.end [16/16] %v1428, 128
        %v1493 = vpop.trf.xlu0
        %v1494 = vpop.trf.xlu0
        %v1495 = vpop.trf.xlu0
        %v1496 = vpop.trf.xlu0
        %v1497 = vpop.trf.xlu0
        %v1498 = vpop.trf.xlu0
        %v1499 = vpop.trf.xlu0
        %v1500 = vpop.trf.xlu0
        %v1501 = vpop.trf.xlu0
        %v1502 = vpop.trf.xlu0
        %v1503 = vpop.trf.xlu0
        %v1504 = vpop.trf.xlu0
        %v1505 = vpop.trf.xlu0
        %v1506 = vpop.trf.xlu0
        %v1507 = vpop.trf.xlu0
        %v1508 = vpop.trf.xlu0
        %1509 = vxpose.xlu0.b32.start [1/16] %v1429, 128
        %1510 = vxpose.xlu0.b32.cont [2/16] %v1430, 128
        %1511 = vxpose.xlu0.b32.cont [3/16] %v1431, 128
        %1512 = vxpose.xlu0.b32.cont [4/16] %v1432, 128
        %1513 = vxpose.xlu0.b32.cont [5/16] %v1433, 128
        %1514 = vxpose.xlu0.b32.cont [6/16] %v1434, 128
        %1515 = vxpose.xlu0.b32.cont [7/16] %v1435, 128
        %1516 = vxpose.xlu0.b32.cont [8/16] %v1436, 128
        %1517 = vxpose.xlu0.b32.cont [9/16] %v1437, 128
        %1518 = vxpose.xlu0.b32.cont [10/16] %v1438, 128
        %1519 = vxpose.xlu0.b32.cont [11/16] %v1439, 128
        %1520 = vxpose.xlu0.b32.cont [12/16] %v1440, 128
        %1521 = vxpose.xlu0.b32.cont [13/16] %v1441, 128
        %1522 = vxpose.xlu0.b32.cont [14/16] %v1442, 128
        %1523 = vxpose.xlu0.b32.cont [15/16] %v1443, 128
        %1524 = vxpose.xlu0.b32.end [16/16] %v1444, 128
        %v1525 = vpop.trf.xlu0
        %v1526 = vpop.trf.xlu0
        %v1527 = vpop.trf.xlu0
        %v1528 = vpop.trf.xlu0
        %v1529 = vpop.trf.xlu0
        %v1530 = vpop.trf.xlu0
        %v1531 = vpop.trf.xlu0
        %v1532 = vpop.trf.xlu0
        %v1533 = vpop.trf.xlu0
        %v1534 = vpop.trf.xlu0
        %v1535 = vpop.trf.xlu0
        %v1536 = vpop.trf.xlu0
        %v1537 = vpop.trf.xlu0
        %v1538 = vpop.trf.xlu0
        %v1539 = vpop.trf.xlu0
        %v1540 = vpop.trf.xlu0
        %1541 = vxpose.xlu0.b32.start [1/16] %v1445, 128
        %1542 = vxpose.xlu0.b32.cont [2/16] %v1446, 128
        %1543 = vxpose.xlu0.b32.cont [3/16] %v1447, 128
        %1544 = vxpose.xlu0.b32.cont [4/16] %v1448, 128
        %1545 = vxpose.xlu0.b32.cont [5/16] %v1449, 128
        %1546 = vxpose.xlu0.b32.cont [6/16] %v1450, 128
        %1547 = vxpose.xlu0.b32.cont [7/16] %v1451, 128
        %1548 = vxpose.xlu0.b32.cont [8/16] %v1452, 128
        %1549 = vxpose.xlu0.b32.cont [9/16] %v1453, 128
        %1550 = vxpose.xlu0.b32.cont [10/16] %v1454, 128
        %1551 = vxpose.xlu0.b32.cont [11/16] %v1455, 128
        %1552 = vxpose.xlu0.b32.cont [12/16] %v1456, 128
        %1553 = vxpose.xlu0.b32.cont [13/16] %v1457, 128
        %1554 = vxpose.xlu0.b32.cont [14/16] %v1458, 128
        %1555 = vxpose.xlu0.b32.cont [15/16] %v1459, 128
        %1556 = vxpose.xlu0.b32.end [16/16] %v1460, 128
        %v1557 = vpop.trf.xlu0
        %v1558 = vpop.trf.xlu0
        %v1559 = vpop.trf.xlu0
        %v1560 = vpop.trf.xlu0
        %v1561 = vpop.trf.xlu0
        %v1562 = vpop.trf.xlu0
        %v1563 = vpop.trf.xlu0
        %v1564 = vpop.trf.xlu0
        %v1565 = vpop.trf.xlu0
        %v1566 = vpop.trf.xlu0
        %v1567 = vpop.trf.xlu0
        %v1568 = vpop.trf.xlu0
        %v1569 = vpop.trf.xlu0
        %v1570 = vpop.trf.xlu0
        %v1571 = vpop.trf.xlu0
        %v1572 = vpop.trf.xlu0
        %1573 = vxpose.xlu0.b32.start [1/16] %v1461, 128
        %1574 = vxpose.xlu0.b32.cont [2/16] %v1462, 128
        %1575 = vxpose.xlu0.b32.cont [3/16] %v1463, 128
        %1576 = vxpose.xlu0.b32.cont [4/16] %v1464, 128
        %1577 = vxpose.xlu0.b32.cont [5/16] %v1465, 128
        %1578 = vxpose.xlu0.b32.cont [6/16] %v1466, 128
        %1579 = vxpose.xlu0.b32.cont [7/16] %v1467, 128
        %1580 = vxpose.xlu0.b32.cont [8/16] %v1468, 128
        %1581 = vxpose.xlu0.b32.cont [9/16] %v1469, 128
        %1582 = vxpose.xlu0.b32.cont [10/16] %v1470, 128
        %1583 = vxpose.xlu0.b32.cont [11/16] %v1471, 128
        %1584 = vxpose.xlu0.b32.cont [12/16] %v1472, 128
        %1585 = vxpose.xlu0.b32.cont [13/16] %v1473, 128
        %1586 = vxpose.xlu0.b32.cont [14/16] %v1474, 128
        %1587 = vxpose.xlu0.b32.cont [15/16] %v1475, 128
        %1588 = vxpose.xlu0.b32.end [16/16] %v1476, 128
        %v1589 = vpop.trf.xlu0
        %v1590 = vpop.trf.xlu0
        %v1591 = vpop.trf.xlu0
        %v1592 = vpop.trf.xlu0
        %v1593 = vpop.trf.xlu0
        %v1594 = vpop.trf.xlu0
        %v1595 = vpop.trf.xlu0
        %v1596 = vpop.trf.xlu0
        %v1597 = vpop.trf.xlu0
        %v1598 = vpop.trf.xlu0
        %v1599 = vpop.trf.xlu0
        %v1600 = vpop.trf.xlu0
        %v1601 = vpop.trf.xlu0
        %v1602 = vpop.trf.xlu0
        %v1603 = vpop.trf.xlu0
        %v1604 = vpop.trf.xlu0
        %1605 = vst [vmem:[%s283] sm:$0xff] %v1493
        %1606 = vst [vmem:[%s283 + $0x8] sm:$0xff] %v1525
        %1607 = vst [vmem:[%s283 + $0x10] sm:$0xff] %v1557
        %1608 = vst [vmem:[%s283 + $0x18] sm:$0xff] %v1589
        %1609 = vst [vmem:[%s283 + $0x20] sm:$0xff] %v1494
        %1610 = vst [vmem:[%s283 + $0x28] sm:$0xff] %v1526
        %1611 = vst [vmem:[%s283 + $0x30] sm:$0xff] %v1558
        %1612 = vst [vmem:[%s283 + $0x38] sm:$0xff] %v1590
        %1613 = vst [vmem:[%s283 + $0x40] sm:$0xff] %v1495
        %1614 = vst [vmem:[%s283 + $0x48] sm:$0xff] %v1527
        %1615 = vst [vmem:[%s283 + $0x50] sm:$0xff] %v1559
        %1616 = vst [vmem:[%s283 + $0x58] sm:$0xff] %v1591
        %1617 = vst [vmem:[%s283 + $0x60] sm:$0xff] %v1496
        %1618 = vst [vmem:[%s283 + $0x68] sm:$0xff] %v1528
        %1619 = vst [vmem:[%s283 + $0x70] sm:$0xff] %v1560
        %1620 = vst [vmem:[%s283 + $0x78] sm:$0xff] %v1592
        %p1621 = scmp.lt.s32.totalorder %s24, 1
        %s1622 = scalar_select %p1621, %s24, 1
        %s1623 = smul.addr %s1622, 16
        %s1624 = smul.addr %s1623, 8
        %s1625 = scalar_lea.vmem %s5, %s1624
        %s1626 = sand.u32 %s168, 1
        %s1627 = scalar_lea.sflag [#allocation4], %s1626
        %s1628 = sand.u32 %s168, 1
        %s1629 = scalar_lea.vmem [#allocation5], %s1628
        // Predicated region
        $region45: #{cpcm_forward.1} parent=39 // pred_check
          %p1630 = pneg %p152
        $region46: #{cpcm_forward.1} parent=39 // pred_check_branch
          %1632 = sbr.rel (%p1630) target = $region48
        $region47: #{cpcm_forward.1} parent=39 // pred_region
          _
        $region48: #{cpcm_forward.1} parent=39 // pred_fallthru
          _
        // Predicated region
        $region49: #{cpcm_forward.1} parent=39 // pred_check
          %p1633 = pneg %p178
        $region50: #{cpcm_forward.1} parent=39 // pred_check_branch
          %1635 = sbr.rel (%p1633) target = $region52
        $region51: #{cpcm_forward.1} parent=39 // pred_region
          %1637 = vsyncadd %s1627, 0
          %s1638 = scalar_lea.hbm %s6, %s24
          %s1640 = sshll.u32 %s1629, 4
          %s1641 = int_to_ptr.vmem [resolvable:$true] %s1640
          %s1642 = sshll.u32 %s1638, 4
          %s1643 = int_to_ptr.hbm [resolvable:$true] %s1642
          %1645 = dma.vmem_to_hbm [thread:$0]  %s1641, 16, %s1643, %s1627
        $region52: #{cpcm_forward.1} parent=39 // pred_fallthru
          _
      $region40: #{cpcm_forward.1} parent=5 // pred_fallthru
        _
      %p1646 = scmp.le.s32.totalorder 2, %s19
      // Predicated region
      $region53: #{cpcm_forward.1} parent=5 // pred_check
        %p1647 = pneg %p1646
      $region54: #{cpcm_forward.1} parent=5 // pred_check_branch
        %1649 = sbr.rel (%p1647) target = $region56
      $region55: #{cpcm_forward.1} parent=5 // pred_region
        %s1650 = ssub.s32 %s19, 2
        // Predicated region
        $region57: #{cpcm_forward.1} parent=55 // pred_check
          %p1651 = pneg %p158
        $region58: #{cpcm_forward.1} parent=55 // pred_check_branch
          %1653 = sbr.rel (%p1651) target = $region60
        $region59: #{cpcm_forward.1} parent=55 // pred_region
          %p1654 = scmp.lt.s32.totalorder %s25, 1
          %s1655 = scalar_select %p1654, %s25, 1
          %s1656 = smul.addr %s1655, 16
          %s1657 = smul.addr %s1656, 8
          %s1658 = scalar_lea.vmem %s5, %s1657
        $region60: #{cpcm_forward.1} parent=55 // pred_fallthru
          _
        // Predicated region
        $region61: #{cpcm_forward.1} parent=55 // pred_check
          %p1659 = pneg %p184
        $region62: #{cpcm_forward.1} parent=55 // pred_check_branch
          %1661 = sbr.rel (%p1659) target = $region64
        $region63: #{cpcm_forward.1} parent=55 // pred_region
          %s1662 = sand.u32 %s169, 1
          %s1663 = scalar_lea.sflag [#allocation4], %s1662
          %s1664 = sand.u32 %s169, 1
          %s1665 = scalar_lea.vmem [#allocation5], %s1664
          %1667 = dma.done %s1663, 16
        $region64: #{cpcm_forward.1} parent=55 // pred_fallthru
          _
      $region56: #{cpcm_forward.1} parent=5 // pred_fallthru
        _
    $region6: #{cpcm_forward.1} parent=1 // loop_footer
      %s23 = sadd.s32 1, %s19
    $region7: #{cpcm_forward.1} parent=1 // loop_footer_branch
      %18 = sbr.rel target = $region3
    $region8: #{cpcm_forward.1} parent=1 // loop_exit
      _
    %1668 = vsyncpa [#allocation3], 1
    %s1669 = scalar_lea.sflag [#allocation3], 1
    %1670 = vsyncpa %s1669, 1
    %1671 = vsyncpa [#allocation4], 1
    %s1672 = scalar_lea.sflag [#allocation4], 1
    %1673 = vsyncpa %s1672, 1

</llo_original>
